<compile_context>
chip_gen: v7x
topology: tpu7x:2x2x1
jax: 0.10.0
libtpu: 0.0.40
codegen_flags: <defaults>
</compile_context>

<pallas_src>
import functools

import jax
import jax.numpy as jnp
from jax.experimental import pallas as pl
from jax.experimental.pallas import tpu as pltpu

LEAKY_SLOPE = 0.2  # negative slope used by NLayerLeakyMLP's LeakyReLU


# ----------------------------------------------------------------------------- kernel
def _np_transition_kernel(num_hidden, tile_n, mm_dtype, *refs):
    """One grid step = one lane-dense sample tile; all D latent MLPs batched.

    refs (inputs):  inp (LD+D, TILE_N), W0 (D*H, LD+D), w0_cur (D*H, 1), b0 (D*H, 1),
                    [Wk_blockdiag (D*H, D*H), bk (D*H, 1)] * num_hidden,
                    W_out_block (D, D*H), b_out (D, 1)
    refs (outputs): residuals (D, TILE_N), logabsdet (1, TILE_N)
    refs (scratch): buf (D*H, 2*TILE_N) [mm_dtype], zbuf (D*H, 2*TILE_N) [f32],
                    zout (D, 2*TILE_N) [f32]
    """
    inp_ref = refs[0]
    idx = 1
    w0_ref, w0c_ref, b0_ref = refs[idx], refs[idx + 1], refs[idx + 2]
    idx += 3
    hid_refs = []
    for _ in range(num_hidden):
        hid_refs.append((refs[idx], refs[idx + 1]))
        idx += 2
    wout_ref, bout_ref = refs[idx], refs[idx + 1]
    idx += 2
    res_ref, lad_ref = refs[idx], refs[idx + 1]
    idx += 2
    buf_ref, zbuf_ref, zout_ref = refs[idx], refs[idx + 1], refs[idx + 2]

    # ---- layer 0: shared across latents, one dense MXU dot -------------------------
    pre = (jnp.dot(w0_ref[...], inp_ref[...].astype(mm_dtype),
                   preferred_element_type=jnp.float32)
           + b0_ref[...])                                   # (D*H, TILE_N)
    deriv = jnp.where(pre > 0, 1.0, LEAKY_SLOPE)
    h = pre * deriv                                         # primal activations (f32)
    tan = w0c_ref[...] * deriv                              # tangent wrt x_t^i (f32)

    # ---- hidden layers: block-diagonal weights, fused primal+tangent dot -----------
    for w_ref, b_ref in hid_refs:
        # Ref half-stores replace jnp.concatenate; dot reads straight from the ref.
        buf_ref[:, :tile_n] = h.astype(buf_ref.dtype)
        buf_ref[:, tile_n:] = tan.astype(buf_ref.dtype)
        zbuf_ref[...] = jnp.dot(w_ref[...], buf_ref[...],
                                preferred_element_type=jnp.float32)
        # Result halves are read back through ref views (no array-slice copies).
        pre = zbuf_ref[:, :tile_n] + b_ref[...]
        deriv = jnp.where(pre > 0, 1.0, LEAKY_SLOPE)
        h = pre * deriv
        tan = zbuf_ref[:, tile_n:] * deriv

    # ---- output layer: block (D, D*H) weight, fused primal+tangent -----------------
    buf_ref[:, :tile_n] = h.astype(buf_ref.dtype)
    buf_ref[:, tile_n:] = tan.astype(buf_ref.dtype)
    zout_ref[...] = jnp.dot(wout_ref[...], buf_ref[...],
                            preferred_element_type=jnp.float32)        # (D, 2*TILE_N)
    res_ref[...] = zout_ref[:, :tile_n] + bout_ref[...]
    dres = zout_ref[:, tile_n:]
    lad_ref[...] = jnp.sum(jnp.log(jnp.abs(dres)), axis=0, keepdims=True)


# ----------------------------------------------------------------------------- wrapper
def _build_inputs_transposed(x, lags):
    """Unfolded inputs directly in (L*D + D, N) layout, N = batch*(T-L) on lanes."""
    B, T, D = x.shape
    nwin = T - lags
    xt = jnp.transpose(x, (2, 0, 1))                                   # (D, B, T)
    yy_t = jnp.stack([xt[:, :, l:l + nwin] for l in range(lags)], axis=0)
    yy_t = yy_t.reshape(lags * D, B * nwin)                            # row = l*D + d
    xx_t = xt[:, :, lags:].reshape(D, B * nwin)
    return jnp.concatenate([yy_t, xx_t], axis=0), nwin                 # (LD + D, N)


def _pick_tile_n(n, dh, ld_d, requested):
    """Lane-dense N tile (multiple of 128) capped by VMEM; >=2 tiles for v7x."""
    try:
        vmem_cap = int(pltpu.get_tpu_info().vmem_capacity_bytes)
    except Exception:  # conservative fallback (v7x: 64 MiB / TensorCore)
        vmem_cap = 64 * 1024 * 1024
    budget = vmem_cap // 3
    bytes_per_col = 4 * (8 * dh + 2 * ld_d + 16)    # scratch + temps + io per column
    tile_cap = max(128, (budget // bytes_per_col) // 128 * 128)
    n_cols = ((max(n, 1) + 127) // 128) * 128       # round-up, NOT next_power_of_2
    tile = max(128, min(requested, tile_cap, n_cols) // 128 * 128)
    # v7x has two TensorCores: keep at least 2 tiles on the parallel axis if possible.
    if tile >= n_cols and n_cols >= 256:
        tile = min(tile, ((n_cols // 2 + 127) // 128) * 128)
    return tile


def _prepare_batched_weights(weights, biases, lags, D, matmul_dtype):
    """Stack per-latent MLP weights into dense/block-diagonal batched forms."""
    LD = lags * D
    H = weights[0].shape[2]
    DH = D * H
    num_hidden = len(weights) - 2
    eye = jnp.eye(D, dtype=jnp.float32)

    w0 = weights[0].astype(jnp.float32)                        # (D, LD+1, H)
    w0_hist = jnp.transpose(w0[:, :LD, :], (0, 2, 1)).reshape(DH, LD)
    w0_cur = w0[:, LD, :]                                      # (D, H)
    cur_cols = (w0_cur[:, :, None] * eye[:, None, :]).reshape(DH, D)
    w0_big = jnp.concatenate([w0_hist, cur_cols], axis=1)      # (DH, LD + D)
    w0_cur_all = w0_cur.reshape(DH, 1)
    b0_all = biases[0].astype(jnp.float32).reshape(DH, 1)

    hid = []
    for k in range(num_hidden):
        wk = jnp.transpose(weights[1 + k].astype(jnp.float32), (0, 2, 1))   # (D,H,H)
        wk_blk = (eye[:, None, :, None] * wk[:, :, None, :]).reshape(DH, DH)
        bk = biases[1 + k].astype(jnp.float32).reshape(DH, 1)
        hid.append((wk_blk.astype(matmul_dtype), bk))

    wout = weights[-1].astype(jnp.float32)[:, :, 0]            # (D, H)
    wout_blk = (eye[:, :, None] * wout[:, None, :]).reshape(D, DH)
    bout = biases[-1].astype(jnp.float32).reshape(D, 1)
    return (w0_big.astype(matmul_dtype), w0_cur_all, b0_all, hid,
            wout_blk.astype(matmul_dtype), bout, H, DH, num_hidden)


def np_transition_prior_forward(x, params, lags, masks=None, tile_n=2048,
                                matmul_dtype=jnp.float32):
    """Pallas implementation of NPTransitionPrior.forward (masks=None path)."""
    # TODO(synk): masks != None path (per-latent yy masking) not implemented.
    assert masks is None
    B, T, D = x.shape
    weights, biases = params
    LD = lags * D

    (w0_big, w0_cur_all, b0_all, hid, wout_blk, bout, H, DH,
     num_hidden) = _prepare_batched_weights(weights, biases, lags, D, matmul_dtype)

    inp, nwin = _build_inputs_transposed(x.astype(jnp.float32), lags)  # (LD+D, N)
    N = inp.shape[1]
    tile_n = _pick_tile_n(N, DH, LD + D, tile_n)
    n_pad = pl.cdiv(N, tile_n) * tile_n
    if n_pad != N:
        inp = jnp.pad(inp, ((0, 0), (0, n_pad - N)))
    n_tiles = n_pad // tile_n

    operands = [inp, w0_big, w0_cur_all, b0_all]
    in_specs = [
        pl.BlockSpec((LD + D, tile_n), lambda n: (0, n)),
        # Weights / biases: full blocks with constant index_map -> VMEM-resident.
        pl.BlockSpec((DH, LD + D), lambda n: (0, 0)),
        pl.BlockSpec((DH, 1), lambda n: (0, 0)),
        pl.BlockSpec((DH, 1), lambda n: (0, 0)),
    ]
    for wk_blk, bk in hid:
        operands += [wk_blk, bk]
        in_specs += [pl.BlockSpec((DH, DH), lambda n: (0, 0)),
                     pl.BlockSpec((DH, 1), lambda n: (0, 0))]
    operands += [wout_blk, bout]
    in_specs += [pl.BlockSpec((D, DH), lambda n: (0, 0)),
                 pl.BlockSpec((D, 1), lambda n: (0, 0))]

    out_shape = (
        jax.ShapeDtypeStruct((D, n_pad), jnp.float32),   # residuals (sublane+lane dense)
        jax.ShapeDtypeStruct((1, n_pad), jnp.float32),   # sum_i log|d g_i / d x_t^i|
    )
    out_specs = (
        pl.BlockSpec((D, tile_n), lambda n: (0, n)),
        pl.BlockSpec((1, tile_n), lambda n: (0, n)),
    )

    mm_bytes = 2 if matmul_dtype == jnp.bfloat16 else 4
    scratch_shapes = [
        pltpu.VMEM((DH, 2 * tile_n), matmul_dtype),      # [h | tan] matmul input
        pltpu.VMEM((DH, 2 * tile_n), jnp.float32),       # hidden-layer matmul result
        pltpu.VMEM((D, 2 * tile_n), jnp.float32),        # output-layer matmul result
    ]

    est = (2 * tile_n * (DH * (mm_bytes + 4) + 4 * D)            # persistent scratch
           + 6 * DH * tile_n * 4                                 # live elementwise temps
           + 4 * (LD + 2 * D + 1) * tile_n * 4                   # double-buffered io
           + 2 * (DH * (LD + D) + num_hidden * DH * DH + D * DH) * mm_bytes
           + 2 * (2 * DH + D) * 4)                               # resident weights/biases
    vmem_limit = int(min(48 * 1024 * 1024, max(24 * 1024 * 1024, 2 * est)))

    kernel = functools.partial(_np_transition_kernel, num_hidden, tile_n, matmul_dtype)
    res_dn, lad_1n = pl.pallas_call(
        kernel,
        grid=(n_tiles,),
        in_specs=in_specs,
        out_specs=out_specs,
        out_shape=out_shape,
        scratch_shapes=scratch_shapes,
        compiler_params=pltpu.CompilerParams(
            dimension_semantics=("parallel",),
            vmem_limit_bytes=vmem_limit),
    )(*operands)

    residuals = res_dn[:, :N].T.reshape(B, nwin, D)                 # (B, T-L, D)
    sum_lad = jnp.sum(lad_1n[0, :N].reshape(B, nwin), axis=1)       # (B,)
    return residuals, sum_lad


# ------------------------------------------------------------------- parameter init
def init_params(key, lags, latent_size, num_layers=3, hidden_dim=64):
    """Deterministic synthetic weights, stacked over the latent_size axis.

    Per latent i, layer weights are stored (fan_in, fan_out); biases (1, fan_out).
    """
    in_features = lags * latent_size + 1
    dims = ([(in_features, hidden_dim)]
            + [(hidden_dim, hidden_dim)] * (num_layers - 1)
            + [(hidden_dim, 1)])
    weights, biases = [], []
    for fin, fout in dims:
        key, kw, kb = jax.random.split(key, 3)
        bound = 1.0 / float(fin) ** 0.5
        weights.append(jax.random.uniform(kw, (latent_size, fin, fout),
                                          jnp.float32, -bound, bound))
        biases.append(jax.random.uniform(kb, (latent_size, 1, fout),
                                         jnp.float32, -bound, bound))
    return weights, biases


# ----------------------------------------------------------------- pure-JAX reference
def _unfold_reference(x, lags):
    """Literal torch .unfold(1, L+1, 1).swapaxes(2,3).reshape(-1, L+1, D) equivalent."""
    B, T, D = x.shape
    nwin = T - lags
    windows = jnp.stack([x[:, s:s + lags + 1, :] for s in range(nwin)], axis=1)
    xr = windows.reshape(-1, lags + 1, D)
    return xr[:, :-1, :].reshape(-1, lags * D), xr[:, -1, :], nwin


def _mlp_ref(z, ws, bs):
    h = z
    for w, b in zip(ws[:-1], bs[:-1]):
        h = jnp.dot(h, w, precision=jax.lax.Precision.HIGHEST) + b[0]
        h = jnp.where(h > 0, h, LEAKY_SLOPE * h)
    return jnp.dot(h, ws[-1], precision=jax.lax.Precision.HIGHEST) + bs[-1][0]


def reference_forward(x, params, lags):
    B, T, D = x.shape
    weights, biases = params
    yy, xx, nwin = _unfold_reference(x.astype(jnp.float32), lags)
    residuals, sum_lad = [], 0.0
    for i in range(D):
        ws = [w[i] for w in weights]
        bs = [b[i] for b in biases]
        inputs = jnp.concatenate([yy, xx[:, i:i + 1]], axis=-1)

        def per_sample(z, ws=ws, bs=bs):
            return _mlp_ref(z[None, :], ws, bs)[0]

        residual = _mlp_ref(inputs, ws, bs)                       # (N, 1)
        jac = jax.vmap(jax.jacfwd(per_sample))(inputs)            # (N, 1, L*D+1)
        sum_lad = sum_lad + jnp.log(jnp.abs(jac[:, 0, -1]))
        residuals.append(residual)
    residuals = jnp.concatenate(residuals, axis=-1).reshape(B, nwin, D)
    sum_lad = jnp.sum(sum_lad.reshape(B, nwin), axis=1)
    return residuals, sum_lad


# --------------------------------------------------------------------------------- main
if __name__ == "__main__":
    B, T, D, L = 2, 8, 4, 2           # batch, sequence length, latent_size, lags
    hidden_dim, num_layers = 32, 3

    key = jax.random.PRNGKey(0)
    kx, kp = jax.random.split(key)
    x = jax.random.normal(kx, (B, T, D), dtype=jnp.float32)
    params = init_params(kp, L, D, num_layers=num_layers, hidden_dim=hidden_dim)

    res, lad = np_transition_prior_forward(x, params, L)
    jax.block_until_ready((res, lad))

    res_ref, lad_ref = reference_forward(x, params, L)
    assert res.shape == (B, T - L, D), res.shape
    assert lad.shape == (B,), lad.shape
    assert jnp.allclose(res, res_ref, rtol=1e-3, atol=1e-4), "residuals mismatch"
    assert jnp.allclose(lad, lad_ref, rtol=1e-3, atol=1e-4), "logabsdet mismatch"

    # Exercise the bf16 matmul-operand path (v6e/v7x MXU-rate path, looser numerics).
    res_bf, lad_bf = np_transition_prior_forward(x, params, L,
                                                 matmul_dtype=jnp.bfloat16)
    jax.block_until_ready((res_bf, lad_bf))
    assert bool(jnp.all(jnp.isfinite(res_bf))) and bool(jnp.all(jnp.isfinite(lad_bf)))

    print("KERNEL_OK")
</pallas_src>

<mosaic_0001>
module attributes {stable_mosaic.version = 11 : i64} {
  func.func @_np_transition_kernel(%arg0: i32, %arg1: memref<12x128xf32, #tpu.memory_space<vmem>>, %arg2: memref<128x12xf32, #tpu.memory_space<vmem>>, %arg3: memref<128x1xf32, #tpu.memory_space<vmem>>, %arg4: memref<128x1xf32, #tpu.memory_space<vmem>>, %arg5: memref<128x128xf32, #tpu.memory_space<vmem>>, %arg6: memref<128x1xf32, #tpu.memory_space<vmem>>, %arg7: memref<128x128xf32, #tpu.memory_space<vmem>>, %arg8: memref<128x1xf32, #tpu.memory_space<vmem>>, %arg9: memref<4x128xf32, #tpu.memory_space<vmem>>, %arg10: memref<4x1xf32, #tpu.memory_space<vmem>>, %arg11: memref<4x128xf32, #tpu.memory_space<vmem>>, %arg12: memref<1x128xf32, #tpu.memory_space<vmem>>, %arg13: memref<128x256xf32, #tpu.memory_space<vmem>>, %arg14: memref<128x256xf32, #tpu.memory_space<vmem>>, %arg15: memref<4x256xf32, #tpu.memory_space<vmem>>) attributes {dimension_semantics = [#tpu.dimension_semantics<parallel>], iteration_bounds = array<i64: 1>, scalar_prefetch = 0 : i64, scratch_operands = 3 : i64, tpu.core_type = #tpu.core_type<tc>, window_params = [{transform_indices = @transform_0, window_bounds = array<i64: 12, 128>}, {pipeline_mode = #tpu.pipeline_mode<synchronous>, transform_indices = @transform_1, window_bounds = array<i64: 128, 12>}, {pipeline_mode = #tpu.pipeline_mode<synchronous>, transform_indices = @transform_2, window_bounds = array<i64: 128, 1>}, {pipeline_mode = #tpu.pipeline_mode<synchronous>, transform_indices = @transform_3, window_bounds = array<i64: 128, 1>}, {pipeline_mode = #tpu.pipeline_mode<synchronous>, transform_indices = @transform_4, window_bounds = array<i64: 128, 128>}, {pipeline_mode = #tpu.pipeline_mode<synchronous>, transform_indices = @transform_5, window_bounds = array<i64: 128, 1>}, {pipeline_mode = #tpu.pipeline_mode<synchronous>, transform_indices = @transform_6, window_bounds = array<i64: 128, 128>}, {pipeline_mode = #tpu.pipeline_mode<synchronous>, transform_indices = @transform_7, window_bounds = array<i64: 128, 1>}, {pipeline_mode = #tpu.pipeline_mode<synchronous>, transform_indices = @transform_8, window_bounds = array<i64: 4, 128>}, {pipeline_mode = #tpu.pipeline_mode<synchronous>, transform_indices = @transform_9, window_bounds = array<i64: 4, 1>}, {transform_indices = @transform_10, window_bounds = array<i64: 4, 128>}, {transform_indices = @transform_11, window_bounds = array<i64: 1, 128>}]} {
    %c0 = arith.constant 0 : index
    %c0_0 = arith.constant 0 : index
    %0 = vector.load %arg2[%c0, %c0_0] : memref<128x12xf32, #tpu.memory_space<vmem>>, vector<128x12xf32>
    %c0_1 = arith.constant 0 : index
    %c0_2 = arith.constant 0 : index
    %1 = vector.load %arg1[%c0_1, %c0_2] : memref<12x128xf32, #tpu.memory_space<vmem>>, vector<12x128xf32>
    %cst = arith.constant dense<0.000000e+00> : vector<128x128xf32>
    %2 = tpu.matmul %0, %1, %cst {dimension_numbers = #tpu.dot_dimension_numbers<[1], [0], [0], [1], [0, 0, 1, 1], [], []>} : vector<128x12xf32>, vector<12x128xf32>, vector<128x128xf32> -> vector<128x128xf32>
    %c0_3 = arith.constant 0 : index
    %c0_4 = arith.constant 0 : index
    %3 = vector.load %arg4[%c0_3, %c0_4] : memref<128x1xf32, #tpu.memory_space<vmem>>, vector<128x1xf32>
    %4 = vector.broadcast %3 : vector<128x1xf32> to vector<128x128xf32>
    %5 = arith.addf %2, %4 : vector<128x128xf32>
    %cst_5 = arith.constant 0.000000e+00 : f32
    %6 = vector.broadcast %cst_5 : f32 to vector<128x128xf32>
    %7 = arith.cmpf ogt, %5, %6 : vector<128x128xf32>
    %cst_6 = arith.constant 1.000000e+00 : f32
    %cst_7 = arith.constant 2.000000e-01 : f32
    %8 = vector.broadcast %cst_6 : f32 to vector<128x128xf32>
    %9 = vector.broadcast %cst_7 : f32 to vector<128x128xf32>
    %10 = arith.select %7, %8, %9 : vector<128x128xi1>, vector<128x128xf32>
    %11 = arith.mulf %5, %10 : vector<128x128xf32>
    %c0_8 = arith.constant 0 : index
    %c0_9 = arith.constant 0 : index
    %12 = vector.load %arg3[%c0_8, %c0_9] : memref<128x1xf32, #tpu.memory_space<vmem>>, vector<128x1xf32>
    %13 = vector.broadcast %12 : vector<128x1xf32> to vector<128x128xf32>
    %14 = arith.mulf %13, %10 : vector<128x128xf32>
    %c0_10 = arith.constant 0 : index
    %c0_11 = arith.constant 0 : index
    %15 = vector.load %arg13[%c0_10, %c0_11] : memref<128x256xf32, #tpu.memory_space<vmem>>, vector<128x128xf32>
    tpu.vector_store %arg13[%c0_10, %c0_11], %11 {strides = array<i32>} : memref<128x256xf32, #tpu.memory_space<vmem>>, vector<128x128xf32>,
    %c0_12 = arith.constant 0 : index
    %c128 = arith.constant 128 : index
    %16 = vector.load %arg13[%c0_12, %c128] : memref<128x256xf32, #tpu.memory_space<vmem>>, vector<128x128xf32>
    tpu.vector_store %arg13[%c0_12, %c128], %14 {strides = array<i32>} : memref<128x256xf32, #tpu.memory_space<vmem>>, vector<128x128xf32>,
    %c0_13 = arith.constant 0 : index
    %c0_14 = arith.constant 0 : index
    %17 = vector.load %arg5[%c0_13, %c0_14] : memref<128x128xf32, #tpu.memory_space<vmem>>, vector<128x128xf32>
    %c0_15 = arith.constant 0 : index
    %c0_16 = arith.constant 0 : index
    %18 = vector.load %arg13[%c0_15, %c0_16] : memref<128x256xf32, #tpu.memory_space<vmem>>, vector<128x256xf32>
    %cst_17 = arith.constant dense<0.000000e+00> : vector<128x256xf32>
    %19 = tpu.matmul %17, %18, %cst_17 {dimension_numbers = #tpu.dot_dimension_numbers<[1], [0], [0], [1], [0, 0, 1, 1], [], []>} : vector<128x128xf32>, vector<128x256xf32>, vector<128x256xf32> -> vector<128x256xf32>
    %c0_18 = arith.constant 0 : index
    %c0_19 = arith.constant 0 : index
    %20 = vector.load %arg14[%c0_18, %c0_19] : memref<128x256xf32, #tpu.memory_space<vmem>>, vector<128x256xf32>
    tpu.vector_store %arg14[%c0_18, %c0_19], %19 {strides = array<i32>} : memref<128x256xf32, #tpu.memory_space<vmem>>, vector<128x256xf32>,
    %c0_20 = arith.constant 0 : index
    %c0_21 = arith.constant 0 : index
    %21 = vector.load %arg14[%c0_20, %c0_21] : memref<128x256xf32, #tpu.memory_space<vmem>>, vector<128x128xf32>
    %c0_22 = arith.constant 0 : index
    %c0_23 = arith.constant 0 : index
    %22 = vector.load %arg6[%c0_22, %c0_23] : memref<128x1xf32, #tpu.memory_space<vmem>>, vector<128x1xf32>
    %23 = vector.broadcast %22 : vector<128x1xf32> to vector<128x128xf32>
    %24 = arith.addf %21, %23 : vector<128x128xf32>
    %cst_24 = arith.constant 0.000000e+00 : f32
    %25 = vector.broadcast %cst_24 : f32 to vector<128x128xf32>
    %26 = arith.cmpf ogt, %24, %25 : vector<128x128xf32>
    %cst_25 = arith.constant 1.000000e+00 : f32
    %cst_26 = arith.constant 2.000000e-01 : f32
    %27 = vector.broadcast %cst_25 : f32 to vector<128x128xf32>
    %28 = vector.broadcast %cst_26 : f32 to vector<128x128xf32>
    %29 = arith.select %26, %27, %28 : vector<128x128xi1>, vector<128x128xf32>
    %30 = arith.mulf %24, %29 : vector<128x128xf32>
    %c0_27 = arith.constant 0 : index
    %c128_28 = arith.constant 128 : index
    %31 = vector.load %arg14[%c0_27, %c128_28] : memref<128x256xf32, #tpu.memory_space<vmem>>, vector<128x128xf32>
    %32 = arith.mulf %31, %29 : vector<128x128xf32>
    %c0_29 = arith.constant 0 : index
    %c0_30 = arith.constant 0 : index
    %33 = vector.load %arg13[%c0_29, %c0_30] : memref<128x256xf32, #tpu.memory_space<vmem>>, vector<128x128xf32>
    tpu.vector_store %arg13[%c0_29, %c0_30], %30 {strides = array<i32>} : memref<128x256xf32, #tpu.memory_space<vmem>>, vector<128x128xf32>,
    %c0_31 = arith.constant 0 : index
    %c128_32 = arith.constant 128 : index
    %34 = vector.load %arg13[%c0_31, %c128_32] : memref<128x256xf32, #tpu.memory_space<vmem>>, vector<128x128xf32>
    tpu.vector_store %arg13[%c0_31, %c128_32], %32 {strides = array<i32>} : memref<128x256xf32, #tpu.memory_space<vmem>>, vector<128x128xf32>,
    %c0_33 = arith.constant 0 : index
    %c0_34 = arith.constant 0 : index
    %35 = vector.load %arg7[%c0_33, %c0_34] : memref<128x128xf32, #tpu.memory_space<vmem>>, vector<128x128xf32>
    %c0_35 = arith.constant 0 : index
    %c0_36 = arith.constant 0 : index
    %36 = vector.load %arg13[%c0_35, %c0_36] : memref<128x256xf32, #tpu.memory_space<vmem>>, vector<128x256xf32>
    %cst_37 = arith.constant dense<0.000000e+00> : vector<128x256xf32>
    %37 = tpu.matmul %35, %36, %cst_37 {dimension_numbers = #tpu.dot_dimension_numbers<[1], [0], [0], [1], [0, 0, 1, 1], [], []>} : vector<128x128xf32>, vector<128x256xf32>, vector<128x256xf32> -> vector<128x256xf32>
    %c0_38 = arith.constant 0 : index
    %c0_39 = arith.constant 0 : index
    %38 = vector.load %arg14[%c0_38, %c0_39] : memref<128x256xf32, #tpu.memory_space<vmem>>, vector<128x256xf32>
    tpu.vector_store %arg14[%c0_38, %c0_39], %37 {strides = array<i32>} : memref<128x256xf32, #tpu.memory_space<vmem>>, vector<128x256xf32>,
    %c0_40 = arith.constant 0 : index
    %c0_41 = arith.constant 0 : index
    %39 = vector.load %arg14[%c0_40, %c0_41] : memref<128x256xf32, #tpu.memory_space<vmem>>, vector<128x128xf32>
    %c0_42 = arith.constant 0 : index
    %c0_43 = arith.constant 0 : index
    %40 = vector.load %arg8[%c0_42, %c0_43] : memref<128x1xf32, #tpu.memory_space<vmem>>, vector<128x1xf32>
    %41 = vector.broadcast %40 : vector<128x1xf32> to vector<128x128xf32>
    %42 = arith.addf %39, %41 : vector<128x128xf32>
    %cst_44 = arith.constant 0.000000e+00 : f32
    %43 = vector.broadcast %cst_44 : f32 to vector<128x128xf32>
    %44 = arith.cmpf ogt, %42, %43 : vector<128x128xf32>
    %cst_45 = arith.constant 1.000000e+00 : f32
    %cst_46 = arith.constant 2.000000e-01 : f32
    %45 = vector.broadcast %cst_45 : f32 to vector<128x128xf32>
    %46 = vector.broadcast %cst_46 : f32 to vector<128x128xf32>
    %47 = arith.select %44, %45, %46 : vector<128x128xi1>, vector<128x128xf32>
    %48 = arith.mulf %42, %47 : vector<128x128xf32>
    %c0_47 = arith.constant 0 : index
    %c128_48 = arith.constant 128 : index
    %49 = vector.load %arg14[%c0_47, %c128_48] : memref<128x256xf32, #tpu.memory_space<vmem>>, vector<128x128xf32>
    %50 = arith.mulf %49, %47 : vector<128x128xf32>
    %c0_49 = arith.constant 0 : index
    %c0_50 = arith.constant 0 : index
    %51 = vector.load %arg13[%c0_49, %c0_50] : memref<128x256xf32, #tpu.memory_space<vmem>>, vector<128x128xf32>
    tpu.vector_store %arg13[%c0_49, %c0_50], %48 {strides = array<i32>} : memref<128x256xf32, #tpu.memory_space<vmem>>, vector<128x128xf32>,
    %c0_51 = arith.constant 0 : index
    %c128_52 = arith.constant 128 : index
    %52 = vector.load %arg13[%c0_51, %c128_52] : memref<128x256xf32, #tpu.memory_space<vmem>>, vector<128x128xf32>
    tpu.vector_store %arg13[%c0_51, %c128_52], %50 {strides = array<i32>} : memref<128x256xf32, #tpu.memory_space<vmem>>, vector<128x128xf32>,
    %c0_53 = arith.constant 0 : index
    %c0_54 = arith.constant 0 : index
    %53 = vector.load %arg9[%c0_53, %c0_54] : memref<4x128xf32, #tpu.memory_space<vmem>>, vector<4x128xf32>
    %c0_55 = arith.constant 0 : index
    %c0_56 = arith.constant 0 : index
    %54 = vector.load %arg13[%c0_55, %c0_56] : memref<128x256xf32, #tpu.memory_space<vmem>>, vector<128x256xf32>
    %cst_57 = arith.constant dense<0.000000e+00> : vector<4x256xf32>
    %55 = tpu.matmul %53, %54, %cst_57 {dimension_numbers = #tpu.dot_dimension_numbers<[1], [0], [0], [1], [0, 0, 1, 1], [], []>} : vector<4x128xf32>, vector<128x256xf32>, vector<4x256xf32> -> vector<4x256xf32>
    %c0_58 = arith.constant 0 : index
    %c0_59 = arith.constant 0 : index
    %56 = vector.load %arg15[%c0_58, %c0_59] : memref<4x256xf32, #tpu.memory_space<vmem>>, vector<4x256xf32>
    tpu.vector_store %arg15[%c0_58, %c0_59], %55 {strides = array<i32>} : memref<4x256xf32, #tpu.memory_space<vmem>>, vector<4x256xf32>,
    %c0_60 = arith.constant 0 : index
    %c0_61 = arith.constant 0 : index
    %57 = vector.load %arg15[%c0_60, %c0_61] : memref<4x256xf32, #tpu.memory_space<vmem>>, vector<4x128xf32>
    %c0_62 = arith.constant 0 : index
    %c0_63 = arith.constant 0 : index
    %58 = vector.load %arg10[%c0_62, %c0_63] : memref<4x1xf32, #tpu.memory_space<vmem>>, vector<4x1xf32>
    %59 = vector.broadcast %58 : vector<4x1xf32> to vector<4x128xf32>
    %60 = arith.addf %57, %59 : vector<4x128xf32>
    %c0_64 = arith.constant 0 : index
    %c0_65 = arith.constant 0 : index
    %61 = vector.load %arg11[%c0_64, %c0_65] : memref<4x128xf32, #tpu.memory_space<vmem>>, vector<4x128xf32>
    tpu.vector_store %arg11[%c0_64, %c0_65], %60 {strides = array<i32>} : memref<4x128xf32, #tpu.memory_space<vmem>>, vector<4x128xf32>,
    %c0_66 = arith.constant 0 : index
    %c128_67 = arith.constant 128 : index
    %62 = vector.load %arg15[%c0_66, %c128_67] : memref<4x256xf32, #tpu.memory_space<vmem>>, vector<4x128xf32>
    %63 = math.absf %62 : vector<4x128xf32>
    %64 = math.log %63 : vector<4x128xf32>
    %cst_68 = arith.constant dense<0.000000e+00> : vector<128xf32>
    %65 = vector.multi_reduction <add>, %64, %cst_68 [0] : vector<4x128xf32> to vector<128xf32>
    %66 = vector.shape_cast %65 : vector<128xf32> to vector<1x128xf32>
    %c0_69 = arith.constant 0 : index
    %c0_70 = arith.constant 0 : index
    %67 = vector.load %arg12[%c0_69, %c0_70] : memref<1x128xf32, #tpu.memory_space<vmem>>, vector<1x128xf32>
    tpu.vector_store %arg12[%c0_69, %c0_70], %66 {strides = array<i32>} : memref<1x128xf32, #tpu.memory_space<vmem>>, vector<1x128xf32>,
    return
  }
  func.func @transform_0(%arg0: i32) -> (i32, i32) {
    %c0_i32 = arith.constant 0 : i32
    %c0_i32_0 = arith.constant 0 : i32
    return %c0_i32, %arg0 : i32, i32
  }
  func.func @transform_1(%arg0: i32) -> (i32, i32) {
    %c0_i32 = arith.constant 0 : i32
    %c0_i32_0 = arith.constant 0 : i32
    %c0_i32_1 = arith.constant 0 : i32
    return %c0_i32, %c0_i32_0 : i32, i32
  }
  func.func @transform_2(%arg0: i32) -> (i32, i32) {
    %c0_i32 = arith.constant 0 : i32
    %c0_i32_0 = arith.constant 0 : i32
    %c0_i32_1 = arith.constant 0 : i32
    return %c0_i32, %c0_i32_0 : i32, i32
  }
  func.func @transform_3(%arg0: i32) -> (i32, i32) {
    %c0_i32 = arith.constant 0 : i32
    %c0_i32_0 = arith.constant 0 : i32
    %c0_i32_1 = arith.constant 0 : i32
    return %c0_i32, %c0_i32_0 : i32, i32
  }
  func.func @transform_4(%arg0: i32) -> (i32, i32) {
    %c0_i32 = arith.constant 0 : i32
    %c0_i32_0 = arith.constant 0 : i32
    %c0_i32_1 = arith.constant 0 : i32
    return %c0_i32, %c0_i32_0 : i32, i32
  }
  func.func @transform_5(%arg0: i32) -> (i32, i32) {
    %c0_i32 = arith.constant 0 : i32
    %c0_i32_0 = arith.constant 0 : i32
    %c0_i32_1 = arith.constant 0 : i32
    return %c0_i32, %c0_i32_0 : i32, i32
  }
  func.func @transform_6(%arg0: i32) -> (i32, i32) {
    %c0_i32 = arith.constant 0 : i32
    %c0_i32_0 = arith.constant 0 : i32
    %c0_i32_1 = arith.constant 0 : i32
    return %c0_i32, %c0_i32_0 : i32, i32
  }
  func.func @transform_7(%arg0: i32) -> (i32, i32) {
    %c0_i32 = arith.constant 0 : i32
    %c0_i32_0 = arith.constant 0 : i32
    %c0_i32_1 = arith.constant 0 : i32
    return %c0_i32, %c0_i32_0 : i32, i32
  }
  func.func @transform_8(%arg0: i32) -> (i32, i32) {
    %c0_i32 = arith.constant 0 : i32
    %c0_i32_0 = arith.constant 0 : i32
    %c0_i32_1 = arith.constant 0 : i32
    return %c0_i32, %c0_i32_0 : i32, i32
  }
  func.func @transform_9(%arg0: i32) -> (i32, i32) {
    %c0_i32 = arith.constant 0 : i32
    %c0_i32_0 = arith.constant 0 : i32
    %c0_i32_1 = arith.constant 0 : i32
    return %c0_i32, %c0_i32_0 : i32, i32
  }
  func.func @transform_10(%arg0: i32) -> (i32, i32) {
    %c0_i32 = arith.constant 0 : i32
    %c0_i32_0 = arith.constant 0 : i32
    return %c0_i32, %arg0 : i32, i32
  }
  func.func @transform_11(%arg0: i32) -> (i32, i32) {
    %c0_i32 = arith.constant 0 : i32
    %c0_i32_0 = arith.constant 0 : i32
    return %c0_i32, %arg0 : i32, i32
  }
}

</mosaic_0001>

<llo_original>
// kernel: tpu_custom_call.1
$region0: #{tpu_custom_call.1}
  #allocation0 [shape = 'u32[]', space=smem, size = 0x4, offset = 0x4, fixed_abs, tag = 'smem constant byte address 0x4 - core index']
  #allocation1 [shape = 'u32[144,128]{1,0:T(1,128)}', space=vmem, size = 0x12000, scoped, tag = 'internal scratch']
  #allocation2 [shape = 'f32[128,256]{1,0:T(8,128)}', space=vmem, size = 0x20000, scoped, tag = 'scratch operand']
  #allocation3 [shape = 'f32[128,256]{1,0:T(8,128)}', space=vmem, size = 0x20000, scoped, tag = 'scratch operand']
  #allocation4 [shape = 'f32[4,256]{1,0:T(4,128)}', space=vmem, size = 0x1000, scoped, tag = 'scratch operand']
  %s0 = inlined_call_operand.vmem [shape: f32[12,128], index: 0, kind: input, shape index: {}]
  %s1 = inlined_call_operand.vmem [shape: f32[128,12], index: 1, kind: input, shape index: {}]
  %s2 = inlined_call_operand.vmem [shape: f32[128,1], index: 2, kind: input, shape index: {}]
  %s3 = inlined_call_operand.vmem [shape: f32[128,1], index: 3, kind: input, shape index: {}]
  %s4 = inlined_call_operand.vmem [shape: f32[128,128], index: 4, kind: input, shape index: {}]
  %s5 = inlined_call_operand.vmem [shape: f32[128,1], index: 5, kind: input, shape index: {}]
  %s6 = inlined_call_operand.vmem [shape: f32[128,128], index: 6, kind: input, shape index: {}]
  %s7 = inlined_call_operand.vmem [shape: f32[128,1], index: 7, kind: input, shape index: {}]
  %s8 = inlined_call_operand.vmem [shape: f32[4,128], index: 8, kind: input, shape index: {}]
  %s9 = inlined_call_operand.vmem [shape: f32[4,1], index: 9, kind: input, shape index: {}]
  %s10 = inlined_call_operand.hbm [shape: f32[4,128], index: 10, kind: output, shape index: {0}]
  %s11 = inlined_call_operand.hbm [shape: f32[1,128], index: 11, kind: output, shape index: {1}]
  %12 = xla_tuple %s10, %s11
  %s13 = sld [smem:[#allocation0]]
  $region58: #{tpu_custom_call.1} parent=0
    _
  %s15 = ssub.s32 1, %s13
  %s16 = scalar_select 0, %s15, %s13
  $region1: #{tpu_custom_call.1} parent=0
    #allocation5 [shape = 'u8[2048]{0}', space=vmem, size = 0x800, scoped, tag = 'output window, operand 0, single buffered']
    #allocation6 [shape = 's32[1]{0}', space=sflag, size = 0x4, scoped, tag = 'scoped memory for tpu_custom_call.1']
    #allocation7 [shape = 'u8[512]{0}', space=vmem, size = 0x400, scoped, tag = 'output window, operand 1, single buffered']
    #allocation8 [shape = 's32[1]{0}', space=sflag, size = 0x4, scoped, tag = 'scoped memory for tpu_custom_call.1']
    %17 = vsyncpa [#allocation6], 0
    %18 = vsyncpa [#allocation8], 0
    // Predicated region
    $region2: #{tpu_custom_call.1} parent=1 // pred_check
      _
    $region3: #{tpu_custom_call.1} parent=1 // pred_check_branch
      %20 = sbr.rel (0) target = $region5
    $region4: #{tpu_custom_call.1} parent=1 // pred_region
      _
    $region5: #{tpu_custom_call.1} parent=1 // pred_fallthru
      _
    // Predicated region
    $region6: #{tpu_custom_call.1} parent=1 // pred_check
      _
    $region7: #{tpu_custom_call.1} parent=1 // pred_check_branch
      %22 = sbr.rel (0) target = $region9
    $region8: #{tpu_custom_call.1} parent=1 // pred_region
      _
    $region9: #{tpu_custom_call.1} parent=1 // pred_fallthru
      _
    // Predicated region
    $region10: #{tpu_custom_call.1} parent=1 // pred_check
      _
    $region11: #{tpu_custom_call.1} parent=1 // pred_check_branch
      %24 = sbr.rel (0) target = $region13
    $region12: #{tpu_custom_call.1} parent=1 // pred_region
      _
    $region13: #{tpu_custom_call.1} parent=1 // pred_fallthru
      _
    // Predicated region
    $region14: #{tpu_custom_call.1} parent=1 // pred_check
      _
    $region15: #{tpu_custom_call.1} parent=1 // pred_check_branch
      %26 = sbr.rel (0) target = $region17
    $region16: #{tpu_custom_call.1} parent=1 // pred_region
      _
    $region17: #{tpu_custom_call.1} parent=1 // pred_fallthru
      _
    // Predicated region
    $region18: #{tpu_custom_call.1} parent=1 // pred_check
      _
    $region19: #{tpu_custom_call.1} parent=1 // pred_check_branch
      %28 = sbr.rel (0) target = $region21
    $region20: #{tpu_custom_call.1} parent=1 // pred_region
      _
    $region21: #{tpu_custom_call.1} parent=1 // pred_fallthru
      _
    // Predicated region
    $region22: #{tpu_custom_call.1} parent=1 // pred_check
      _
    $region23: #{tpu_custom_call.1} parent=1 // pred_check_branch
      %30 = sbr.rel (0) target = $region25
    $region24: #{tpu_custom_call.1} parent=1 // pred_region
      _
    $region25: #{tpu_custom_call.1} parent=1 // pred_fallthru
      _
    // Predicated region
    $region26: #{tpu_custom_call.1} parent=1 // pred_check
      _
    $region27: #{tpu_custom_call.1} parent=1 // pred_check_branch
      %32 = sbr.rel (0) target = $region29
    $region28: #{tpu_custom_call.1} parent=1 // pred_region
      _
    $region29: #{tpu_custom_call.1} parent=1 // pred_fallthru
      _
    // Predicated region
    $region30: #{tpu_custom_call.1} parent=1 // pred_check
      _
    $region31: #{tpu_custom_call.1} parent=1 // pred_check_branch
      %34 = sbr.rel (0) target = $region33
    $region32: #{tpu_custom_call.1} parent=1 // pred_region
      _
    $region33: #{tpu_custom_call.1} parent=1 // pred_fallthru
      _
    // Predicated region
    $region34: #{tpu_custom_call.1} parent=1 // pred_check
      _
    $region35: #{tpu_custom_call.1} parent=1 // pred_check_branch
      %36 = sbr.rel (0) target = $region37
    $region36: #{tpu_custom_call.1} parent=1 // pred_region
      _
    $region37: #{tpu_custom_call.1} parent=1 // pred_fallthru
      _
    // Predicated region
    $region38: #{tpu_custom_call.1} parent=1 // pred_check
      _
    $region39: #{tpu_custom_call.1} parent=1 // pred_check_branch
      %38 = sbr.rel (0) target = $region41
    $region40: #{tpu_custom_call.1} parent=1 // pred_region
      _
    $region41: #{tpu_custom_call.1} parent=1 // pred_fallthru
      _
    %v39 = vld [vmem:[%s1] sm:$0xff]
    %v40 = vld [vmem:[%s1 + $0x8] sm:$0xff]
    %v41 = vld [vmem:[%s1 + $0x10] sm:$0xff]
    %v42 = vld [vmem:[%s1 + $0x18] sm:$0xff]
    %v43 = vld [vmem:[%s1 + $0x20] sm:$0xff]
    %v44 = vld [vmem:[%s1 + $0x28] sm:$0xff]
    %v45 = vld [vmem:[%s1 + $0x30] sm:$0xff]
    %v46 = vld [vmem:[%s1 + $0x38] sm:$0xff]
    %v47 = vld [vmem:[%s1 + $0x40] sm:$0xff]
    %v48 = vld [vmem:[%s1 + $0x48] sm:$0xff]
    %v49 = vld [vmem:[%s1 + $0x50] sm:$0xff]
    %v50 = vld [vmem:[%s1 + $0x58] sm:$0xff]
    %v51 = vld [vmem:[%s1 + $0x60] sm:$0xff]
    %v52 = vld [vmem:[%s1 + $0x68] sm:$0xff]
    %v53 = vld [vmem:[%s1 + $0x70] sm:$0xff]
    %v54 = vld [vmem:[%s1 + $0x78] sm:$0xff]
    %v55 = vld [vmem:[%s0] sm:$0xff]
    %v56 = vld [vmem:[%s0 + $0x8] sm:$0xf]
    %v57 = vld [vmem:[%s3] sm:$0xff]
    %v58 = vld [vmem:[%s3 + $0x8] sm:$0xff]
    %v59 = vld [vmem:[%s3 + $0x10] sm:$0xff]
    %v60 = vld [vmem:[%s3 + $0x18] sm:$0xff]
    %v61 = vld [vmem:[%s3 + $0x20] sm:$0xff]
    %v62 = vld [vmem:[%s3 + $0x28] sm:$0xff]
    %v63 = vld [vmem:[%s3 + $0x30] sm:$0xff]
    %v64 = vld [vmem:[%s3 + $0x38] sm:$0xff]
    %v65 = vld [vmem:[%s3 + $0x40] sm:$0xff]
    %v66 = vld [vmem:[%s3 + $0x48] sm:$0xff]
    %v67 = vld [vmem:[%s3 + $0x50] sm:$0xff]
    %v68 = vld [vmem:[%s3 + $0x58] sm:$0xff]
    %v69 = vld [vmem:[%s3 + $0x60] sm:$0xff]
    %v70 = vld [vmem:[%s3 + $0x68] sm:$0xff]
    %v71 = vld [vmem:[%s3 + $0x70] sm:$0xff]
    %v72 = vld [vmem:[%s3 + $0x78] sm:$0xff]
    %74 = vset.pattern.permute.xlu0 0
    %75 = vperm.xlu0 %74, %v57
    %v76 = vpop.permute.xlu0 %75
    %79 = vset.pattern.permute.xlu0 0
    %80 = vperm.xlu0 %79, %v58
    %v81 = vpop.permute.xlu0 %80
    %84 = vset.pattern.permute.xlu0 0
    %85 = vperm.xlu0 %84, %v59
    %v86 = vpop.permute.xlu0 %85
    %89 = vset.pattern.permute.xlu0 0
    %90 = vperm.xlu0 %89, %v60
    %v91 = vpop.permute.xlu0 %90
    %94 = vset.pattern.permute.xlu0 0
    %95 = vperm.xlu0 %94, %v61
    %v96 = vpop.permute.xlu0 %95
    %99 = vset.pattern.permute.xlu0 0
    %100 = vperm.xlu0 %99, %v62
    %v101 = vpop.permute.xlu0 %100
    %104 = vset.pattern.permute.xlu0 0
    %105 = vperm.xlu0 %104, %v63
    %v106 = vpop.permute.xlu0 %105
    %109 = vset.pattern.permute.xlu0 0
    %110 = vperm.xlu0 %109, %v64
    %v111 = vpop.permute.xlu0 %110
    %114 = vset.pattern.permute.xlu0 0
    %115 = vperm.xlu0 %114, %v65
    %v116 = vpop.permute.xlu0 %115
    %119 = vset.pattern.permute.xlu0 0
    %120 = vperm.xlu0 %119, %v66
    %v121 = vpop.permute.xlu0 %120
    %124 = vset.pattern.permute.xlu0 0
    %125 = vperm.xlu0 %124, %v67
    %v126 = vpop.permute.xlu0 %125
    %129 = vset.pattern.permute.xlu0 0
    %130 = vperm.xlu0 %129, %v68
    %v131 = vpop.permute.xlu0 %130
    %134 = vset.pattern.permute.xlu0 0
    %135 = vperm.xlu0 %134, %v69
    %v136 = vpop.permute.xlu0 %135
    %139 = vset.pattern.permute.xlu0 0
    %140 = vperm.xlu0 %139, %v70
    %v141 = vpop.permute.xlu0 %140
    %144 = vset.pattern.permute.xlu0 0
    %145 = vperm.xlu0 %144, %v71
    %v146 = vpop.permute.xlu0 %145
    %149 = vset.pattern.permute.xlu0 0
    %150 = vperm.xlu0 %149, %v72
    %v151 = vpop.permute.xlu0 %150
    %vm153 = vcmask 97280
    %v155 = vsel %vm153, %v39, 0
    %v158 = vsel %vm153, %v40, 0
    %v161 = vsel %vm153, %v41, 0
    %v164 = vsel %vm153, %v42, 0
    %v167 = vsel %vm153, %v43, 0
    %v170 = vsel %vm153, %v44, 0
    %v173 = vsel %vm153, %v45, 0
    %v176 = vsel %vm153, %v46, 0
    %v179 = vsel %vm153, %v47, 0
    %v182 = vsel %vm153, %v48, 0
    %v185 = vsel %vm153, %v49, 0
    %v188 = vsel %vm153, %v50, 0
    %v191 = vsel %vm153, %v51, 0
    %v194 = vsel %vm153, %v52, 0
    %v197 = vsel %vm153, %v53, 0
    %v200 = vsel %vm153, %v54, 0
    %vm202 = vcmask 1043456
    %v204 = vsel %vm202, %v56, 0
    %206 = vmatprep.subr.mxu0 0.0
    %207 = vmatpush1.msra.mxu0 %v55
    %208 = vmatprep.subr.mxu0 0.0
    %209 = vmatpush1.msra.mxu0 %v204
    %210 = vmatprep.subr.mxu0 0.0
    %211 = vmatpush1.msra.mxu0 0.0
    %212 = vmatprep.subr.mxu0 0.0
    %213 = vmatpush1.msra.mxu0 0.0
    %214 = vmatprep.subr.mxu0 0.0
    %215 = vmatpush1.msra.mxu0 0.0
    %216 = vmatprep.subr.mxu0 0.0
    %217 = vmatpush1.msra.mxu0 0.0
    %218 = vmatprep.subr.mxu0 0.0
    %219 = vmatpush1.msra.mxu0 0.0
    %220 = vmatprep.subr.mxu0 0.0
    %221 = vmatpush1.msra.mxu0 0.0
    %222 = vmatprep.subr.mxu0 0.0
    %223 = vmatpush1.msra.mxu0 0.0
    %224 = vmatprep.subr.mxu0 0.0
    %225 = vmatpush1.msra.mxu0 0.0
    %226 = vmatprep.subr.mxu0 0.0
    %227 = vmatpush1.msra.mxu0 0.0
    %228 = vmatprep.subr.mxu0 0.0
    %229 = vmatpush1.msra.mxu0 0.0
    %230 = vmatprep.subr.mxu0 0.0
    %231 = vmatpush1.msra.mxu0 0.0
    %232 = vmatprep.subr.mxu0 0.0
    %233 = vmatpush1.msra.mxu0 0.0
    %234 = vmatprep.subr.mxu0 0.0
    %235 = vmatpush1.msra.mxu0 0.0
    %236 = vmatprep.subr.mxu0 0.0
    %237 = vmatpush1.msra.mxu0 0.0
    %238 = vmatprep.subr.mxu0 0.0
    %239 = vmatpush1.msra.mxu0 0.0
    %240 = vmatprep.subr.mxu0 0.0
    %241 = vmatpush1.msra.mxu0 0.0
    %242 = vmatprep.subr.mxu0 0.0
    %243 = vmatpush1.msra.mxu0 0.0
    %244 = vmatprep.subr.mxu0 0.0
    %245 = vmatpush1.msra.mxu0 0.0
    %246 = vmatprep.subr.mxu0 0.0
    %247 = vmatpush1.msra.mxu0 0.0
    %248 = vmatprep.subr.mxu0 0.0
    %249 = vmatpush1.msra.mxu0 0.0
    %250 = vmatprep.subr.mxu0 0.0
    %251 = vmatpush1.msra.mxu0 0.0
    %252 = vmatprep.subr.mxu0 0.0
    %253 = vmatpush1.msra.mxu0 0.0
    %254 = vmatprep.subr.mxu0 0.0
    %255 = vmatpush1.msra.mxu0 0.0
    %256 = vmatprep.subr.mxu0 0.0
    %257 = vmatpush1.msra.mxu0 0.0
    %258 = vmatprep.subr.mxu0 0.0
    %259 = vmatpush1.msra.mxu0 0.0
    %260 = vmatprep.subr.mxu0 0.0
    %261 = vmatpush1.msra.mxu0 0.0
    %262 = vmatprep.subr.mxu0 0.0
    %263 = vmatpush1.msra.mxu0 0.0
    %264 = vmatprep.subr.mxu0 0.0
    %265 = vmatpush1.msra.mxu0 0.0
    %266 = vmatprep.subr.mxu0 0.0
    %267 = vmatpush1.msra.mxu0 0.0
    %268 = vmatprep.subr.mxu0 0.0
    %269 = vmatpush1.msra.mxu0 0.0
    %270 = vmatprep.mubr.f32.mxu0 0.0
    %271 = vmatmul.mubr.f32.gmra.mrb[0].mxu0 %v155
    %v272 = vpop.f32.mrb[0].mxu0
    %v273 = vadd.f32 %v76, %v272
    %v274 = vpop.f32.mrb[0].mxu0
    %275 = vmatprep.mubr.f32.mxu0 0.0
    %276 = vmatmul.mubr.f32.gmra.mrb[0].mxu0 %v158
    %v277 = vpop.f32.mrb[0].mxu0
    %v278 = vadd.f32 %v81, %v277
    %v279 = vpop.f32.mrb[0].mxu0
    %280 = vmatprep.mubr.f32.mxu0 0.0
    %281 = vmatmul.mubr.f32.gmra.mrb[0].mxu0 %v161
    %v282 = vpop.f32.mrb[0].mxu0
    %v283 = vadd.f32 %v86, %v282
    %v284 = vpop.f32.mrb[0].mxu0
    %285 = vmatprep.mubr.f32.mxu0 0.0
    %286 = vmatmul.mubr.f32.gmra.mrb[0].mxu0 %v164
    %v287 = vpop.f32.mrb[0].mxu0
    %v288 = vadd.f32 %v91, %v287
    %v289 = vpop.f32.mrb[0].mxu0
    %290 = vmatprep.mubr.f32.mxu0 0.0
    %291 = vmatmul.mubr.f32.gmra.mrb[0].mxu0 %v167
    %v292 = vpop.f32.mrb[0].mxu0
    %v293 = vadd.f32 %v96, %v292
    %v294 = vpop.f32.mrb[0].mxu0
    %295 = vmatprep.mubr.f32.mxu0 0.0
    %296 = vmatmul.mubr.f32.gmra.mrb[0].mxu0 %v170
    %v297 = vpop.f32.mrb[0].mxu0
    %v298 = vadd.f32 %v101, %v297
    %v299 = vpop.f32.mrb[0].mxu0
    %300 = vmatprep.mubr.f32.mxu0 0.0
    %301 = vmatmul.mubr.f32.gmra.mrb[0].mxu0 %v173
    %v302 = vpop.f32.mrb[0].mxu0
    %v303 = vadd.f32 %v106, %v302
    %v304 = vpop.f32.mrb[0].mxu0
    %305 = vmatprep.mubr.f32.mxu0 0.0
    %306 = vmatmul.mubr.f32.gmra.mrb[0].mxu0 %v176
    %v307 = vpop.f32.mrb[0].mxu0
    %v308 = vadd.f32 %v111, %v307
    %v309 = vpop.f32.mrb[0].mxu0
    %310 = vmatprep.mubr.f32.mxu0 0.0
    %311 = vmatmul.mubr.f32.gmra.mrb[0].mxu0 %v179
    %v312 = vpop.f32.mrb[0].mxu0
    %v313 = vadd.f32 %v116, %v312
    %v314 = vpop.f32.mrb[0].mxu0
    %315 = vmatprep.mubr.f32.mxu0 0.0
    %316 = vmatmul.mubr.f32.gmra.mrb[0].mxu0 %v182
    %v317 = vpop.f32.mrb[0].mxu0
    %v318 = vadd.f32 %v121, %v317
    %v319 = vpop.f32.mrb[0].mxu0
    %320 = vmatprep.mubr.f32.mxu0 0.0
    %321 = vmatmul.mubr.f32.gmra.mrb[0].mxu0 %v185
    %v322 = vpop.f32.mrb[0].mxu0
    %v323 = vadd.f32 %v126, %v322
    %v324 = vpop.f32.mrb[0].mxu0
    %325 = vmatprep.mubr.f32.mxu0 0.0
    %326 = vmatmul.mubr.f32.gmra.mrb[0].mxu0 %v188
    %v327 = vpop.f32.mrb[0].mxu0
    %v328 = vadd.f32 %v131, %v327
    %v329 = vpop.f32.mrb[0].mxu0
    %330 = vmatprep.mubr.f32.mxu0 0.0
    %331 = vmatmul.mubr.f32.gmra.mrb[0].mxu0 %v191
    %v332 = vpop.f32.mrb[0].mxu0
    %v333 = vadd.f32 %v136, %v332
    %v334 = vpop.f32.mrb[0].mxu0
    %335 = vmatprep.mubr.f32.mxu0 0.0
    %336 = vmatmul.mubr.f32.gmra.mrb[0].mxu0 %v194
    %v337 = vpop.f32.mrb[0].mxu0
    %v338 = vadd.f32 %v141, %v337
    %v339 = vpop.f32.mrb[0].mxu0
    %340 = vmatprep.mubr.f32.mxu0 0.0
    %341 = vmatmul.mubr.f32.gmra.mrb[0].mxu0 %v197
    %v342 = vpop.f32.mrb[0].mxu0
    %v343 = vadd.f32 %v146, %v342
    %v344 = vpop.f32.mrb[0].mxu0
    %345 = vmatprep.mubr.f32.mxu0 0.0
    %346 = vmatmul.mubr.f32.gmra.mrb[0].mxu0 %v200
    %v347 = vpop.f32.mrb[0].mxu0
    %v348 = vadd.f32 %v151, %v347
    %v349 = vpop.f32.mrb[0].mxu0
    %350 = vdwg.mxu0
    %vm351 = vcmp.gt.f32.partialorder %v273, 0.0
    %vm352 = vcmp.gt.f32.partialorder %v278, 0.0
    %vm353 = vcmp.gt.f32.partialorder %v283, 0.0
    %vm354 = vcmp.gt.f32.partialorder %v288, 0.0
    %vm355 = vcmp.gt.f32.partialorder %v293, 0.0
    %vm356 = vcmp.gt.f32.partialorder %v298, 0.0
    %vm357 = vcmp.gt.f32.partialorder %v303, 0.0
    %vm358 = vcmp.gt.f32.partialorder %v308, 0.0
    %vm359 = vcmp.gt.f32.partialorder %v313, 0.0
    %vm360 = vcmp.gt.f32.partialorder %v318, 0.0
    %vm361 = vcmp.gt.f32.partialorder %v323, 0.0
    %vm362 = vcmp.gt.f32.partialorder %v328, 0.0
    %vm363 = vcmp.gt.f32.partialorder %v333, 0.0
    %vm364 = vcmp.gt.f32.partialorder %v338, 0.0
    %vm365 = vcmp.gt.f32.partialorder %v343, 0.0
    %vm366 = vcmp.gt.f32.partialorder %v348, 0.0
    %v367 = vsel %vm351, 1.0, 0.2
    %v368 = vsel %vm352, 1.0, 0.2
    %v369 = vsel %vm353, 1.0, 0.2
    %v370 = vsel %vm354, 1.0, 0.2
    %v371 = vsel %vm355, 1.0, 0.2
    %v372 = vsel %vm356, 1.0, 0.2
    %v373 = vsel %vm357, 1.0, 0.2
    %v374 = vsel %vm358, 1.0, 0.2
    %v375 = vsel %vm359, 1.0, 0.2
    %v376 = vsel %vm360, 1.0, 0.2
    %v377 = vsel %vm361, 1.0, 0.2
    %v378 = vsel %vm362, 1.0, 0.2
    %v379 = vsel %vm363, 1.0, 0.2
    %v380 = vsel %vm364, 1.0, 0.2
    %v381 = vsel %vm365, 1.0, 0.2
    %v382 = vsel %vm366, 1.0, 0.2
    %v383 = vmul.f32 %v273, %v367
    %v384 = vmul.f32 %v278, %v368
    %v385 = vmul.f32 %v283, %v369
    %v386 = vmul.f32 %v288, %v370
    %v387 = vmul.f32 %v293, %v371
    %v388 = vmul.f32 %v298, %v372
    %v389 = vmul.f32 %v303, %v373
    %v390 = vmul.f32 %v308, %v374
    %v391 = vmul.f32 %v313, %v375
    %v392 = vmul.f32 %v318, %v376
    %v393 = vmul.f32 %v323, %v377
    %v394 = vmul.f32 %v328, %v378
    %v395 = vmul.f32 %v333, %v379
    %v396 = vmul.f32 %v338, %v380
    %v397 = vmul.f32 %v343, %v381
    %v398 = vmul.f32 %v348, %v382
    %v399 = vld [vmem:[%s2] sm:$0xff]
    %v400 = vld [vmem:[%s2 + $0x8] sm:$0xff]
    %v401 = vld [vmem:[%s2 + $0x10] sm:$0xff]
    %v402 = vld [vmem:[%s2 + $0x18] sm:$0xff]
    %v403 = vld [vmem:[%s2 + $0x20] sm:$0xff]
    %v404 = vld [vmem:[%s2 + $0x28] sm:$0xff]
    %v405 = vld [vmem:[%s2 + $0x30] sm:$0xff]
    %v406 = vld [vmem:[%s2 + $0x38] sm:$0xff]
    %v407 = vld [vmem:[%s2 + $0x40] sm:$0xff]
    %v408 = vld [vmem:[%s2 + $0x48] sm:$0xff]
    %v409 = vld [vmem:[%s2 + $0x50] sm:$0xff]
    %v410 = vld [vmem:[%s2 + $0x58] sm:$0xff]
    %v411 = vld [vmem:[%s2 + $0x60] sm:$0xff]
    %v412 = vld [vmem:[%s2 + $0x68] sm:$0xff]
    %v413 = vld [vmem:[%s2 + $0x70] sm:$0xff]
    %v414 = vld [vmem:[%s2 + $0x78] sm:$0xff]
    %416 = vset.pattern.permute.xlu0 0
    %417 = vperm.xlu0 %416, %v399
    %v418 = vpop.permute.xlu0 %417
    %421 = vset.pattern.permute.xlu0 0
    %422 = vperm.xlu0 %421, %v400
    %v423 = vpop.permute.xlu0 %422
    %426 = vset.pattern.permute.xlu0 0
    %427 = vperm.xlu0 %426, %v401
    %v428 = vpop.permute.xlu0 %427
    %431 = vset.pattern.permute.xlu0 0
    %432 = vperm.xlu0 %431, %v402
    %v433 = vpop.permute.xlu0 %432
    %436 = vset.pattern.permute.xlu0 0
    %437 = vperm.xlu0 %436, %v403
    %v438 = vpop.permute.xlu0 %437
    %441 = vset.pattern.permute.xlu0 0
    %442 = vperm.xlu0 %441, %v404
    %v443 = vpop.permute.xlu0 %442
    %446 = vset.pattern.permute.xlu0 0
    %447 = vperm.xlu0 %446, %v405
    %v448 = vpop.permute.xlu0 %447
    %451 = vset.pattern.permute.xlu0 0
    %452 = vperm.xlu0 %451, %v406
    %v453 = vpop.permute.xlu0 %452
    %456 = vset.pattern.permute.xlu0 0
    %457 = vperm.xlu0 %456, %v407
    %v458 = vpop.permute.xlu0 %457
    %461 = vset.pattern.permute.xlu0 0
    %462 = vperm.xlu0 %461, %v408
    %v463 = vpop.permute.xlu0 %462
    %466 = vset.pattern.permute.xlu0 0
    %467 = vperm.xlu0 %466, %v409
    %v468 = vpop.permute.xlu0 %467
    %471 = vset.pattern.permute.xlu0 0
    %472 = vperm.xlu0 %471, %v410
    %v473 = vpop.permute.xlu0 %472
    %476 = vset.pattern.permute.xlu0 0
    %477 = vperm.xlu0 %476, %v411
    %v478 = vpop.permute.xlu0 %477
    %481 = vset.pattern.permute.xlu0 0
    %482 = vperm.xlu0 %481, %v412
    %v483 = vpop.permute.xlu0 %482
    %486 = vset.pattern.permute.xlu0 0
    %487 = vperm.xlu0 %486, %v413
    %v488 = vpop.permute.xlu0 %487
    %491 = vset.pattern.permute.xlu0 0
    %492 = vperm.xlu0 %491, %v414
    %v493 = vpop.permute.xlu0 %492
    %v495 = vmul.f32 %v418, %v367
    %v496 = vmul.f32 %v423, %v368
    %v497 = vmul.f32 %v428, %v369
    %v498 = vmul.f32 %v433, %v370
    %v499 = vmul.f32 %v438, %v371
    %v500 = vmul.f32 %v443, %v372
    %v501 = vmul.f32 %v448, %v373
    %v502 = vmul.f32 %v453, %v374
    %v503 = vmul.f32 %v458, %v375
    %v504 = vmul.f32 %v463, %v376
    %v505 = vmul.f32 %v468, %v377
    %v506 = vmul.f32 %v473, %v378
    %v507 = vmul.f32 %v478, %v379
    %v508 = vmul.f32 %v483, %v380
    %v509 = vmul.f32 %v488, %v381
    %v510 = vmul.f32 %v493, %v382
    %511 = vst [vmem:[#allocation2] sm:$0xff] %v383
    %512 = vst [vmem:[#allocation2 + $0x10] sm:$0xff] %v384
    %513 = vst [vmem:[#allocation2 + $0x20] sm:$0xff] %v385
    %514 = vst [vmem:[#allocation2 + $0x30] sm:$0xff] %v386
    %515 = vst [vmem:[#allocation2 + $0x40] sm:$0xff] %v387
    %516 = vst [vmem:[#allocation2 + $0x50] sm:$0xff] %v388
    %517 = vst [vmem:[#allocation2 + $0x60] sm:$0xff] %v389
    %518 = vst [vmem:[#allocation2 + $0x70] sm:$0xff] %v390
    %519 = vst [vmem:[#allocation2 + $0x80] sm:$0xff] %v391
    %520 = vst [vmem:[#allocation2 + $0x90] sm:$0xff] %v392
    %521 = vst [vmem:[#allocation2 + $0xa0] sm:$0xff] %v393
    %522 = vst [vmem:[#allocation2 + $0xb0] sm:$0xff] %v394
    %523 = vst [vmem:[#allocation2 + $0xc0] sm:$0xff] %v395
    %524 = vst [vmem:[#allocation2 + $0xd0] sm:$0xff] %v396
    %525 = vst [vmem:[#allocation2 + $0xe0] sm:$0xff] %v397
    %526 = vst [vmem:[#allocation2 + $0xf0] sm:$0xff] %v398
    %527 = vst [vmem:[#allocation2 + $0x8] sm:$0xff] %v495
    %528 = vst [vmem:[#allocation2 + $0x18] sm:$0xff] %v496
    %529 = vst [vmem:[#allocation2 + $0x28] sm:$0xff] %v497
    %530 = vst [vmem:[#allocation2 + $0x38] sm:$0xff] %v498
    %531 = vst [vmem:[#allocation2 + $0x48] sm:$0xff] %v499
    %532 = vst [vmem:[#allocation2 + $0x58] sm:$0xff] %v500
    %533 = vst [vmem:[#allocation2 + $0x68] sm:$0xff] %v501
    %534 = vst [vmem:[#allocation2 + $0x78] sm:$0xff] %v502
    %535 = vst [vmem:[#allocation2 + $0x88] sm:$0xff] %v503
    %536 = vst [vmem:[#allocation2 + $0x98] sm:$0xff] %v504
    %537 = vst [vmem:[#allocation2 + $0xa8] sm:$0xff] %v505
    %538 = vst [vmem:[#allocation2 + $0xb8] sm:$0xff] %v506
    %539 = vst [vmem:[#allocation2 + $0xc8] sm:$0xff] %v507
    %540 = vst [vmem:[#allocation2 + $0xd8] sm:$0xff] %v508
    %541 = vst [vmem:[#allocation2 + $0xe8] sm:$0xff] %v509
    %542 = vst [vmem:[#allocation2 + $0xf8] sm:$0xff] %v510
    %v543 = vld [vmem:[%s4] sm:$0xff]
    %v544 = vld [vmem:[%s4 + $0x8] sm:$0xff]
    %v545 = vld [vmem:[%s4 + $0x10] sm:$0xff]
    %v546 = vld [vmem:[%s4 + $0x18] sm:$0xff]
    %v547 = vld [vmem:[%s4 + $0x20] sm:$0xff]
    %v548 = vld [vmem:[%s4 + $0x28] sm:$0xff]
    %v549 = vld [vmem:[%s4 + $0x30] sm:$0xff]
    %v550 = vld [vmem:[%s4 + $0x38] sm:$0xff]
    %v551 = vld [vmem:[%s4 + $0x40] sm:$0xff]
    %v552 = vld [vmem:[%s4 + $0x48] sm:$0xff]
    %v553 = vld [vmem:[%s4 + $0x50] sm:$0xff]
    %v554 = vld [vmem:[%s4 + $0x58] sm:$0xff]
    %v555 = vld [vmem:[%s4 + $0x60] sm:$0xff]
    %v556 = vld [vmem:[%s4 + $0x68] sm:$0xff]
    %v557 = vld [vmem:[%s4 + $0x70] sm:$0xff]
    %v558 = vld [vmem:[%s4 + $0x78] sm:$0xff]
    %v559 = vld [vmem:[#allocation2] sm:$0xff]
    %v560 = vld [vmem:[#allocation2 + $0x8] sm:$0xff]
    %v561 = vld [vmem:[#allocation2 + $0x10] sm:$0xff]
    %v562 = vld [vmem:[#allocation2 + $0x18] sm:$0xff]
    %v563 = vld [vmem:[#allocation2 + $0x20] sm:$0xff]
    %v564 = vld [vmem:[#allocation2 + $0x28] sm:$0xff]
    %v565 = vld [vmem:[#allocation2 + $0x30] sm:$0xff]
    %v566 = vld [vmem:[#allocation2 + $0x38] sm:$0xff]
    %v567 = vld [vmem:[#allocation2 + $0x40] sm:$0xff]
    %v568 = vld [vmem:[#allocation2 + $0x48] sm:$0xff]
    %v569 = vld [vmem:[#allocation2 + $0x50] sm:$0xff]
    %v570 = vld [vmem:[#allocation2 + $0x58] sm:$0xff]
    %v571 = vld [vmem:[#allocation2 + $0x60] sm:$0xff]
    %v572 = vld [vmem:[#allocation2 + $0x68] sm:$0xff]
    %v573 = vld [vmem:[#allocation2 + $0x70] sm:$0xff]
    %v574 = vld [vmem:[#allocation2 + $0x78] sm:$0xff]
    %v575 = vld [vmem:[#allocation2 + $0x80] sm:$0xff]
    %v576 = vld [vmem:[#allocation2 + $0x88] sm:$0xff]
    %v577 = vld [vmem:[#allocation2 + $0x90] sm:$0xff]
    %v578 = vld [vmem:[#allocation2 + $0x98] sm:$0xff]
    %v579 = vld [vmem:[#allocation2 + $0xa0] sm:$0xff]
    %v580 = vld [vmem:[#allocation2 + $0xa8] sm:$0xff]
    %v581 = vld [vmem:[#allocation2 + $0xb0] sm:$0xff]
    %v582 = vld [vmem:[#allocation2 + $0xb8] sm:$0xff]
    %v583 = vld [vmem:[#allocation2 + $0xc0] sm:$0xff]
    %v584 = vld [vmem:[#allocation2 + $0xc8] sm:$0xff]
    %v585 = vld [vmem:[#allocation2 + $0xd0] sm:$0xff]
    %v586 = vld [vmem:[#allocation2 + $0xd8] sm:$0xff]
    %v587 = vld [vmem:[#allocation2 + $0xe0] sm:$0xff]
    %v588 = vld [vmem:[#allocation2 + $0xe8] sm:$0xff]
    %v589 = vld [vmem:[#allocation2 + $0xf0] sm:$0xff]
    %v590 = vld [vmem:[#allocation2 + $0xf8] sm:$0xff]
    %591 = vmatprep.subr.mxu0 %v560
    %592 = vmatpush1.msra.mxu0 %v559
    %593 = vmatprep.subr.mxu0 %v562
    %594 = vmatpush1.msra.mxu0 %v561
    %595 = vmatprep.subr.mxu0 %v564
    %596 = vmatpush1.msra.mxu0 %v563
    %597 = vmatprep.subr.mxu0 %v566
    %598 = vmatpush1.msra.mxu0 %v565
    %599 = vmatprep.subr.mxu0 %v568
    %600 = vmatpush1.msra.mxu0 %v567
    %601 = vmatprep.subr.mxu0 %v570
    %602 = vmatpush1.msra.mxu0 %v569
    %603 = vmatprep.subr.mxu0 %v572
    %604 = vmatpush1.msra.mxu0 %v571
    %605 = vmatprep.subr.mxu0 %v574
    %606 = vmatpush1.msra.mxu0 %v573
    %607 = vmatprep.subr.mxu0 %v576
    %608 = vmatpush1.msra.mxu0 %v575
    %609 = vmatprep.subr.mxu0 %v578
    %610 = vmatpush1.msra.mxu0 %v577
    %611 = vmatprep.subr.mxu0 %v580
    %612 = vmatpush1.msra.mxu0 %v579
    %613 = vmatprep.subr.mxu0 %v582
    %614 = vmatpush1.msra.mxu0 %v581
    %615 = vmatprep.subr.mxu0 %v584
    %616 = vmatpush1.msra.mxu0 %v583
    %617 = vmatprep.subr.mxu0 %v586
    %618 = vmatpush1.msra.mxu0 %v585
    %619 = vmatprep.subr.mxu0 %v588
    %620 = vmatpush1.msra.mxu0 %v587
    %621 = vmatprep.subr.mxu0 %v590
    %622 = vmatpush1.msra.mxu0 %v589
    %623 = vmatprep.subr.mxu0 0.0
    %624 = vmatpush1.msra.mxu0 0.0
    %625 = vmatprep.subr.mxu0 0.0
    %626 = vmatpush1.msra.mxu0 0.0
    %627 = vmatprep.subr.mxu0 0.0
    %628 = vmatpush1.msra.mxu0 0.0
    %629 = vmatprep.subr.mxu0 0.0
    %630 = vmatpush1.msra.mxu0 0.0
    %631 = vmatprep.subr.mxu0 0.0
    %632 = vmatpush1.msra.mxu0 0.0
    %633 = vmatprep.subr.mxu0 0.0
    %634 = vmatpush1.msra.mxu0 0.0
    %635 = vmatprep.subr.mxu0 0.0
    %636 = vmatpush1.msra.mxu0 0.0
    %637 = vmatprep.subr.mxu0 0.0
    %638 = vmatpush1.msra.mxu0 0.0
    %639 = vmatprep.subr.mxu0 0.0
    %640 = vmatpush1.msra.mxu0 0.0
    %641 = vmatprep.subr.mxu0 0.0
    %642 = vmatpush1.msra.mxu0 0.0
    %643 = vmatprep.subr.mxu0 0.0
    %644 = vmatpush1.msra.mxu0 0.0
    %645 = vmatprep.subr.mxu0 0.0
    %646 = vmatpush1.msra.mxu0 0.0
    %647 = vmatprep.subr.mxu0 0.0
    %648 = vmatpush1.msra.mxu0 0.0
    %649 = vmatprep.subr.mxu0 0.0
    %650 = vmatpush1.msra.mxu0 0.0
    %651 = vmatprep.subr.mxu0 0.0
    %652 = vmatpush1.msra.mxu0 0.0
    %653 = vmatprep.subr.mxu0 0.0
    %654 = vmatpush1.msra.mxu0 0.0
    %655 = vmatprep.mubr.f32.mxu0 0.0
    %656 = vmatmul.mubr.f32.gmra.mrb[0].mxu0 %v543
    %v657 = vpop.f32.mrb[0].mxu0
    %v658 = vadd.f32 0.0, %v657
    %v659 = vpop.f32.mrb[0].mxu0
    %v660 = vadd.f32 0.0, %v659
    %661 = vmatprep.mubr.f32.mxu0 0.0
    %662 = vmatmul.mubr.f32.gmra.mrb[0].mxu0 %v544
    %v663 = vpop.f32.mrb[0].mxu0
    %v664 = vadd.f32 0.0, %v663
    %v665 = vpop.f32.mrb[0].mxu0
    %v666 = vadd.f32 0.0, %v665
    %667 = vmatprep.mubr.f32.mxu0 0.0
    %668 = vmatmul.mubr.f32.gmra.mrb[0].mxu0 %v545
    %v669 = vpop.f32.mrb[0].mxu0
    %v670 = vadd.f32 0.0, %v669
    %v671 = vpop.f32.mrb[0].mxu0
    %v672 = vadd.f32 0.0, %v671
    %673 = vmatprep.mubr.f32.mxu0 0.0
    %674 = vmatmul.mubr.f32.gmra.mrb[0].mxu0 %v546
    %v675 = vpop.f32.mrb[0].mxu0
    %v676 = vadd.f32 0.0, %v675
    %v677 = vpop.f32.mrb[0].mxu0
    %v678 = vadd.f32 0.0, %v677
    %679 = vmatprep.mubr.f32.mxu0 0.0
    %680 = vmatmul.mubr.f32.gmra.mrb[0].mxu0 %v547
    %v681 = vpop.f32.mrb[0].mxu0
    %v682 = vadd.f32 0.0, %v681
    %v683 = vpop.f32.mrb[0].mxu0
    %v684 = vadd.f32 0.0, %v683
    %685 = vmatprep.mubr.f32.mxu0 0.0
    %686 = vmatmul.mubr.f32.gmra.mrb[0].mxu0 %v548
    %v687 = vpop.f32.mrb[0].mxu0
    %v688 = vadd.f32 0.0, %v687
    %v689 = vpop.f32.mrb[0].mxu0
    %v690 = vadd.f32 0.0, %v689
    %691 = vmatprep.mubr.f32.mxu0 0.0
    %692 = vmatmul.mubr.f32.gmra.mrb[0].mxu0 %v549
    %v693 = vpop.f32.mrb[0].mxu0
    %v694 = vadd.f32 0.0, %v693
    %v695 = vpop.f32.mrb[0].mxu0
    %v696 = vadd.f32 0.0, %v695
    %697 = vmatprep.mubr.f32.mxu0 0.0
    %698 = vmatmul.mubr.f32.gmra.mrb[0].mxu0 %v550
    %v699 = vpop.f32.mrb[0].mxu0
    %v700 = vadd.f32 0.0, %v699
    %v701 = vpop.f32.mrb[0].mxu0
    %v702 = vadd.f32 0.0, %v701
    %703 = vmatprep.mubr.f32.mxu0 0.0
    %704 = vmatmul.mubr.f32.gmra.mrb[0].mxu0 %v551
    %v705 = vpop.f32.mrb[0].mxu0
    %v706 = vadd.f32 0.0, %v705
    %v707 = vpop.f32.mrb[0].mxu0
    %v708 = vadd.f32 0.0, %v707
    %709 = vmatprep.mubr.f32.mxu0 0.0
    %710 = vmatmul.mubr.f32.gmra.mrb[0].mxu0 %v552
    %v711 = vpop.f32.mrb[0].mxu0
    %v712 = vadd.f32 0.0, %v711
    %v713 = vpop.f32.mrb[0].mxu0
    %v714 = vadd.f32 0.0, %v713
    %715 = vmatprep.mubr.f32.mxu0 0.0
    %716 = vmatmul.mubr.f32.gmra.mrb[0].mxu0 %v553
    %v717 = vpop.f32.mrb[0].mxu0
    %v718 = vadd.f32 0.0, %v717
    %v719 = vpop.f32.mrb[0].mxu0
    %v720 = vadd.f32 0.0, %v719
    %721 = vmatprep.mubr.f32.mxu0 0.0
    %722 = vmatmul.mubr.f32.gmra.mrb[0].mxu0 %v554
    %v723 = vpop.f32.mrb[0].mxu0
    %v724 = vadd.f32 0.0, %v723
    %v725 = vpop.f32.mrb[0].mxu0
    %v726 = vadd.f32 0.0, %v725
    %727 = vmatprep.mubr.f32.mxu0 0.0
    %728 = vmatmul.mubr.f32.gmra.mrb[0].mxu0 %v555
    %v729 = vpop.f32.mrb[0].mxu0
    %v730 = vadd.f32 0.0, %v729
    %v731 = vpop.f32.mrb[0].mxu0
    %v732 = vadd.f32 0.0, %v731
    %733 = vmatprep.mubr.f32.mxu0 0.0
    %734 = vmatmul.mubr.f32.gmra.mrb[0].mxu0 %v556
    %v735 = vpop.f32.mrb[0].mxu0
    %v736 = vadd.f32 0.0, %v735
    %v737 = vpop.f32.mrb[0].mxu0
    %v738 = vadd.f32 0.0, %v737
    %739 = vmatprep.mubr.f32.mxu0 0.0
    %740 = vmatmul.mubr.f32.gmra.mrb[0].mxu0 %v557
    %v741 = vpop.f32.mrb[0].mxu0
    %v742 = vadd.f32 0.0, %v741
    %v743 = vpop.f32.mrb[0].mxu0
    %v744 = vadd.f32 0.0, %v743
    %745 = vmatprep.mubr.f32.mxu0 0.0
    %746 = vmatmul.mubr.f32.gmra.mrb[0].mxu0 %v558
    %v747 = vpop.f32.mrb[0].mxu0
    %v748 = vadd.f32 0.0, %v747
    %v749 = vpop.f32.mrb[0].mxu0
    %v750 = vadd.f32 0.0, %v749
    %751 = vdwg.mxu0
    %752 = vst [vmem:[#allocation3] sm:$0xff] %v658
    %753 = vst [vmem:[#allocation3 + $0x8] sm:$0xff] %v660
    %754 = vst [vmem:[#allocation3 + $0x10] sm:$0xff] %v664
    %755 = vst [vmem:[#allocation3 + $0x18] sm:$0xff] %v666
    %756 = vst [vmem:[#allocation3 + $0x20] sm:$0xff] %v670
    %757 = vst [vmem:[#allocation3 + $0x28] sm:$0xff] %v672
    %758 = vst [vmem:[#allocation3 + $0x30] sm:$0xff] %v676
    %759 = vst [vmem:[#allocation3 + $0x38] sm:$0xff] %v678
    %760 = vst [vmem:[#allocation3 + $0x40] sm:$0xff] %v682
    %761 = vst [vmem:[#allocation3 + $0x48] sm:$0xff] %v684
    %762 = vst [vmem:[#allocation3 + $0x50] sm:$0xff] %v688
    %763 = vst [vmem:[#allocation3 + $0x58] sm:$0xff] %v690
    %764 = vst [vmem:[#allocation3 + $0x60] sm:$0xff] %v694
    %765 = vst [vmem:[#allocation3 + $0x68] sm:$0xff] %v696
    %766 = vst [vmem:[#allocation3 + $0x70] sm:$0xff] %v700
    %767 = vst [vmem:[#allocation3 + $0x78] sm:$0xff] %v702
    %768 = vst [vmem:[#allocation3 + $0x80] sm:$0xff] %v706
    %769 = vst [vmem:[#allocation3 + $0x88] sm:$0xff] %v708
    %770 = vst [vmem:[#allocation3 + $0x90] sm:$0xff] %v712
    %771 = vst [vmem:[#allocation3 + $0x98] sm:$0xff] %v714
    %772 = vst [vmem:[#allocation3 + $0xa0] sm:$0xff] %v718
    %773 = vst [vmem:[#allocation3 + $0xa8] sm:$0xff] %v720
    %774 = vst [vmem:[#allocation3 + $0xb0] sm:$0xff] %v724
    %775 = vst [vmem:[#allocation3 + $0xb8] sm:$0xff] %v726
    %776 = vst [vmem:[#allocation3 + $0xc0] sm:$0xff] %v730
    %777 = vst [vmem:[#allocation3 + $0xc8] sm:$0xff] %v732
    %778 = vst [vmem:[#allocation3 + $0xd0] sm:$0xff] %v736
    %779 = vst [vmem:[#allocation3 + $0xd8] sm:$0xff] %v738
    %780 = vst [vmem:[#allocation3 + $0xe0] sm:$0xff] %v742
    %781 = vst [vmem:[#allocation3 + $0xe8] sm:$0xff] %v744
    %782 = vst [vmem:[#allocation3 + $0xf0] sm:$0xff] %v748
    %783 = vst [vmem:[#allocation3 + $0xf8] sm:$0xff] %v750
    %v784 = vld [vmem:[#allocation3] sm:$0xff]
    %v785 = vld [vmem:[#allocation3 + $0x10] sm:$0xff]
    %v786 = vld [vmem:[#allocation3 + $0x20] sm:$0xff]
    %v787 = vld [vmem:[#allocation3 + $0x30] sm:$0xff]
    %v788 = vld [vmem:[#allocation3 + $0x40] sm:$0xff]
    %v789 = vld [vmem:[#allocation3 + $0x50] sm:$0xff]
    %v790 = vld [vmem:[#allocation3 + $0x60] sm:$0xff]
    %v791 = vld [vmem:[#allocation3 + $0x70] sm:$0xff]
    %v792 = vld [vmem:[#allocation3 + $0x80] sm:$0xff]
    %v793 = vld [vmem:[#allocation3 + $0x90] sm:$0xff]
    %v794 = vld [vmem:[#allocation3 + $0xa0] sm:$0xff]
    %v795 = vld [vmem:[#allocation3 + $0xb0] sm:$0xff]
    %v796 = vld [vmem:[#allocation3 + $0xc0] sm:$0xff]
    %v797 = vld [vmem:[#allocation3 + $0xd0] sm:$0xff]
    %v798 = vld [vmem:[#allocation3 + $0xe0] sm:$0xff]
    %v799 = vld [vmem:[#allocation3 + $0xf0] sm:$0xff]
    %v800 = vld [vmem:[%s5] sm:$0xff]
    %v801 = vld [vmem:[%s5 + $0x8] sm:$0xff]
    %v802 = vld [vmem:[%s5 + $0x10] sm:$0xff]
    %v803 = vld [vmem:[%s5 + $0x18] sm:$0xff]
    %v804 = vld [vmem:[%s5 + $0x20] sm:$0xff]
    %v805 = vld [vmem:[%s5 + $0x28] sm:$0xff]
    %v806 = vld [vmem:[%s5 + $0x30] sm:$0xff]
    %v807 = vld [vmem:[%s5 + $0x38] sm:$0xff]
    %v808 = vld [vmem:[%s5 + $0x40] sm:$0xff]
    %v809 = vld [vmem:[%s5 + $0x48] sm:$0xff]
    %v810 = vld [vmem:[%s5 + $0x50] sm:$0xff]
    %v811 = vld [vmem:[%s5 + $0x58] sm:$0xff]
    %v812 = vld [vmem:[%s5 + $0x60] sm:$0xff]
    %v813 = vld [vmem:[%s5 + $0x68] sm:$0xff]
    %v814 = vld [vmem:[%s5 + $0x70] sm:$0xff]
    %v815 = vld [vmem:[%s5 + $0x78] sm:$0xff]
    %817 = vset.pattern.permute.xlu0 0
    %818 = vperm.xlu0 %817, %v800
    %v819 = vpop.permute.xlu0 %818
    %822 = vset.pattern.permute.xlu0 0
    %823 = vperm.xlu0 %822, %v801
    %v824 = vpop.permute.xlu0 %823
    %827 = vset.pattern.permute.xlu0 0
    %828 = vperm.xlu0 %827, %v802
    %v829 = vpop.permute.xlu0 %828
    %832 = vset.pattern.permute.xlu0 0
    %833 = vperm.xlu0 %832, %v803
    %v834 = vpop.permute.xlu0 %833
    %837 = vset.pattern.permute.xlu0 0
    %838 = vperm.xlu0 %837, %v804
    %v839 = vpop.permute.xlu0 %838
    %842 = vset.pattern.permute.xlu0 0
    %843 = vperm.xlu0 %842, %v805
    %v844 = vpop.permute.xlu0 %843
    %847 = vset.pattern.permute.xlu0 0
    %848 = vperm.xlu0 %847, %v806
    %v849 = vpop.permute.xlu0 %848
    %852 = vset.pattern.permute.xlu0 0
    %853 = vperm.xlu0 %852, %v807
    %v854 = vpop.permute.xlu0 %853
    %857 = vset.pattern.permute.xlu0 0
    %858 = vperm.xlu0 %857, %v808
    %v859 = vpop.permute.xlu0 %858
    %862 = vset.pattern.permute.xlu0 0
    %863 = vperm.xlu0 %862, %v809
    %v864 = vpop.permute.xlu0 %863
    %867 = vset.pattern.permute.xlu0 0
    %868 = vperm.xlu0 %867, %v810
    %v869 = vpop.permute.xlu0 %868
    %872 = vset.pattern.permute.xlu0 0
    %873 = vperm.xlu0 %872, %v811
    %v874 = vpop.permute.xlu0 %873
    %877 = vset.pattern.permute.xlu0 0
    %878 = vperm.xlu0 %877, %v812
    %v879 = vpop.permute.xlu0 %878
    %882 = vset.pattern.permute.xlu0 0
    %883 = vperm.xlu0 %882, %v813
    %v884 = vpop.permute.xlu0 %883
    %887 = vset.pattern.permute.xlu0 0
    %888 = vperm.xlu0 %887, %v814
    %v889 = vpop.permute.xlu0 %888
    %892 = vset.pattern.permute.xlu0 0
    %893 = vperm.xlu0 %892, %v815
    %v894 = vpop.permute.xlu0 %893
    %v896 = vadd.f32 %v784, %v819
    %v897 = vadd.f32 %v785, %v824
    %v898 = vadd.f32 %v786, %v829
    %v899 = vadd.f32 %v787, %v834
    %v900 = vadd.f32 %v788, %v839
    %v901 = vadd.f32 %v789, %v844
    %v902 = vadd.f32 %v790, %v849
    %v903 = vadd.f32 %v791, %v854
    %v904 = vadd.f32 %v792, %v859
    %v905 = vadd.f32 %v793, %v864
    %v906 = vadd.f32 %v794, %v869
    %v907 = vadd.f32 %v795, %v874
    %v908 = vadd.f32 %v796, %v879
    %v909 = vadd.f32 %v797, %v884
    %v910 = vadd.f32 %v798, %v889
    %v911 = vadd.f32 %v799, %v894
    %vm912 = vcmp.gt.f32.partialorder %v896, 0.0
    %vm913 = vcmp.gt.f32.partialorder %v897, 0.0
    %vm914 = vcmp.gt.f32.partialorder %v898, 0.0
    %vm915 = vcmp.gt.f32.partialorder %v899, 0.0
    %vm916 = vcmp.gt.f32.partialorder %v900, 0.0
    %vm917 = vcmp.gt.f32.partialorder %v901, 0.0
    %vm918 = vcmp.gt.f32.partialorder %v902, 0.0
    %vm919 = vcmp.gt.f32.partialorder %v903, 0.0
    %vm920 = vcmp.gt.f32.partialorder %v904, 0.0
    %vm921 = vcmp.gt.f32.partialorder %v905, 0.0
    %vm922 = vcmp.gt.f32.partialorder %v906, 0.0
    %vm923 = vcmp.gt.f32.partialorder %v907, 0.0
    %vm924 = vcmp.gt.f32.partialorder %v908, 0.0
    %vm925 = vcmp.gt.f32.partialorder %v909, 0.0
    %vm926 = vcmp.gt.f32.partialorder %v910, 0.0
    %vm927 = vcmp.gt.f32.partialorder %v911, 0.0
    %v928 = vsel %vm912, 1.0, 0.2
    %v929 = vsel %vm913, 1.0, 0.2
    %v930 = vsel %vm914, 1.0, 0.2
    %v931 = vsel %vm915, 1.0, 0.2
    %v932 = vsel %vm916, 1.0, 0.2
    %v933 = vsel %vm917, 1.0, 0.2
    %v934 = vsel %vm918, 1.0, 0.2
    %v935 = vsel %vm919, 1.0, 0.2
    %v936 = vsel %vm920, 1.0, 0.2
    %v937 = vsel %vm921, 1.0, 0.2
    %v938 = vsel %vm922, 1.0, 0.2
    %v939 = vsel %vm923, 1.0, 0.2
    %v940 = vsel %vm924, 1.0, 0.2
    %v941 = vsel %vm925, 1.0, 0.2
    %v942 = vsel %vm926, 1.0, 0.2
    %v943 = vsel %vm927, 1.0, 0.2
    %v944 = vmul.f32 %v896, %v928
    %v945 = vmul.f32 %v897, %v929
    %v946 = vmul.f32 %v898, %v930
    %v947 = vmul.f32 %v899, %v931
    %v948 = vmul.f32 %v900, %v932
    %v949 = vmul.f32 %v901, %v933
    %v950 = vmul.f32 %v902, %v934
    %v951 = vmul.f32 %v903, %v935
    %v952 = vmul.f32 %v904, %v936
    %v953 = vmul.f32 %v905, %v937
    %v954 = vmul.f32 %v906, %v938
    %v955 = vmul.f32 %v907, %v939
    %v956 = vmul.f32 %v908, %v940
    %v957 = vmul.f32 %v909, %v941
    %v958 = vmul.f32 %v910, %v942
    %v959 = vmul.f32 %v911, %v943
    %v960 = vld [vmem:[#allocation3 + $0x8] sm:$0xff]
    %v961 = vld [vmem:[#allocation3 + $0x18] sm:$0xff]
    %v962 = vld [vmem:[#allocation3 + $0x28] sm:$0xff]
    %v963 = vld [vmem:[#allocation3 + $0x38] sm:$0xff]
    %v964 = vld [vmem:[#allocation3 + $0x48] sm:$0xff]
    %v965 = vld [vmem:[#allocation3 + $0x58] sm:$0xff]
    %v966 = vld [vmem:[#allocation3 + $0x68] sm:$0xff]
    %v967 = vld [vmem:[#allocation3 + $0x78] sm:$0xff]
    %v968 = vld [vmem:[#allocation3 + $0x88] sm:$0xff]
    %v969 = vld [vmem:[#allocation3 + $0x98] sm:$0xff]
    %v970 = vld [vmem:[#allocation3 + $0xa8] sm:$0xff]
    %v971 = vld [vmem:[#allocation3 + $0xb8] sm:$0xff]
    %v972 = vld [vmem:[#allocation3 + $0xc8] sm:$0xff]
    %v973 = vld [vmem:[#allocation3 + $0xd8] sm:$0xff]
    %v974 = vld [vmem:[#allocation3 + $0xe8] sm:$0xff]
    %v975 = vld [vmem:[#allocation3 + $0xf8] sm:$0xff]
    %v976 = vmul.f32 %v960, %v928
    %v977 = vmul.f32 %v961, %v929
    %v978 = vmul.f32 %v962, %v930
    %v979 = vmul.f32 %v963, %v931
    %v980 = vmul.f32 %v964, %v932
    %v981 = vmul.f32 %v965, %v933
    %v982 = vmul.f32 %v966, %v934
    %v983 = vmul.f32 %v967, %v935
    %v984 = vmul.f32 %v968, %v936
    %v985 = vmul.f32 %v969, %v937
    %v986 = vmul.f32 %v970, %v938
    %v987 = vmul.f32 %v971, %v939
    %v988 = vmul.f32 %v972, %v940
    %v989 = vmul.f32 %v973, %v941
    %v990 = vmul.f32 %v974, %v942
    %v991 = vmul.f32 %v975, %v943
    %992 = vst [vmem:[#allocation2] sm:$0xff] %v944
    %993 = vst [vmem:[#allocation2 + $0x10] sm:$0xff] %v945
    %994 = vst [vmem:[#allocation2 + $0x20] sm:$0xff] %v946
    %995 = vst [vmem:[#allocation2 + $0x30] sm:$0xff] %v947
    %996 = vst [vmem:[#allocation2 + $0x40] sm:$0xff] %v948
    %997 = vst [vmem:[#allocation2 + $0x50] sm:$0xff] %v949
    %998 = vst [vmem:[#allocation2 + $0x60] sm:$0xff] %v950
    %999 = vst [vmem:[#allocation2 + $0x70] sm:$0xff] %v951
    %1000 = vst [vmem:[#allocation2 + $0x80] sm:$0xff] %v952
    %1001 = vst [vmem:[#allocation2 + $0x90] sm:$0xff] %v953
    %1002 = vst [vmem:[#allocation2 + $0xa0] sm:$0xff] %v954
    %1003 = vst [vmem:[#allocation2 + $0xb0] sm:$0xff] %v955
    %1004 = vst [vmem:[#allocation2 + $0xc0] sm:$0xff] %v956
    %1005 = vst [vmem:[#allocation2 + $0xd0] sm:$0xff] %v957
    %1006 = vst [vmem:[#allocation2 + $0xe0] sm:$0xff] %v958
    %1007 = vst [vmem:[#allocation2 + $0xf0] sm:$0xff] %v959
    %1008 = vst [vmem:[#allocation2 + $0x8] sm:$0xff] %v976
    %1009 = vst [vmem:[#allocation2 + $0x18] sm:$0xff] %v977
    %1010 = vst [vmem:[#allocation2 + $0x28] sm:$0xff] %v978
    %1011 = vst [vmem:[#allocation2 + $0x38] sm:$0xff] %v979
    %1012 = vst [vmem:[#allocation2 + $0x48] sm:$0xff] %v980
    %1013 = vst [vmem:[#allocation2 + $0x58] sm:$0xff] %v981
    %1014 = vst [vmem:[#allocation2 + $0x68] sm:$0xff] %v982
    %1015 = vst [vmem:[#allocation2 + $0x78] sm:$0xff] %v983
    %1016 = vst [vmem:[#allocation2 + $0x88] sm:$0xff] %v984
    %1017 = vst [vmem:[#allocation2 + $0x98] sm:$0xff] %v985
    %1018 = vst [vmem:[#allocation2 + $0xa8] sm:$0xff] %v986
    %1019 = vst [vmem:[#allocation2 + $0xb8] sm:$0xff] %v987
    %1020 = vst [vmem:[#allocation2 + $0xc8] sm:$0xff] %v988
    %1021 = vst [vmem:[#allocation2 + $0xd8] sm:$0xff] %v989
    %1022 = vst [vmem:[#allocation2 + $0xe8] sm:$0xff] %v990
    %1023 = vst [vmem:[#allocation2 + $0xf8] sm:$0xff] %v991
    %v1024 = vld [vmem:[%s6] sm:$0xff]
    %v1025 = vld [vmem:[%s6 + $0x8] sm:$0xff]
    %v1026 = vld [vmem:[%s6 + $0x10] sm:$0xff]
    %v1027 = vld [vmem:[%s6 + $0x18] sm:$0xff]
    %v1028 = vld [vmem:[%s6 + $0x20] sm:$0xff]
    %v1029 = vld [vmem:[%s6 + $0x28] sm:$0xff]
    %v1030 = vld [vmem:[%s6 + $0x30] sm:$0xff]
    %v1031 = vld [vmem:[%s6 + $0x38] sm:$0xff]
    %v1032 = vld [vmem:[%s6 + $0x40] sm:$0xff]
    %v1033 = vld [vmem:[%s6 + $0x48] sm:$0xff]
    %v1034 = vld [vmem:[%s6 + $0x50] sm:$0xff]
    %v1035 = vld [vmem:[%s6 + $0x58] sm:$0xff]
    %v1036 = vld [vmem:[%s6 + $0x60] sm:$0xff]
    %v1037 = vld [vmem:[%s6 + $0x68] sm:$0xff]
    %v1038 = vld [vmem:[%s6 + $0x70] sm:$0xff]
    %v1039 = vld [vmem:[%s6 + $0x78] sm:$0xff]
    %v1040 = vld [vmem:[#allocation2] sm:$0xff]
    %v1041 = vld [vmem:[#allocation2 + $0x8] sm:$0xff]
    %v1042 = vld [vmem:[#allocation2 + $0x10] sm:$0xff]
    %v1043 = vld [vmem:[#allocation2 + $0x18] sm:$0xff]
    %v1044 = vld [vmem:[#allocation2 + $0x20] sm:$0xff]
    %v1045 = vld [vmem:[#allocation2 + $0x28] sm:$0xff]
    %v1046 = vld [vmem:[#allocation2 + $0x30] sm:$0xff]
    %v1047 = vld [vmem:[#allocation2 + $0x38] sm:$0xff]
    %v1048 = vld [vmem:[#allocation2 + $0x40] sm:$0xff]
    %v1049 = vld [vmem:[#allocation2 + $0x48] sm:$0xff]
    %v1050 = vld [vmem:[#allocation2 + $0x50] sm:$0xff]
    %v1051 = vld [vmem:[#allocation2 + $0x58] sm:$0xff]
    %v1052 = vld [vmem:[#allocation2 + $0x60] sm:$0xff]
    %v1053 = vld [vmem:[#allocation2 + $0x68] sm:$0xff]
    %v1054 = vld [vmem:[#allocation2 + $0x70] sm:$0xff]
    %v1055 = vld [vmem:[#allocation2 + $0x78] sm:$0xff]
    %v1056 = vld [vmem:[#allocation2 + $0x80] sm:$0xff]
    %v1057 = vld [vmem:[#allocation2 + $0x88] sm:$0xff]
    %v1058 = vld [vmem:[#allocation2 + $0x90] sm:$0xff]
    %v1059 = vld [vmem:[#allocation2 + $0x98] sm:$0xff]
    %v1060 = vld [vmem:[#allocation2 + $0xa0] sm:$0xff]
    %v1061 = vld [vmem:[#allocation2 + $0xa8] sm:$0xff]
    %v1062 = vld [vmem:[#allocation2 + $0xb0] sm:$0xff]
    %v1063 = vld [vmem:[#allocation2 + $0xb8] sm:$0xff]
    %v1064 = vld [vmem:[#allocation2 + $0xc0] sm:$0xff]
    %v1065 = vld [vmem:[#allocation2 + $0xc8] sm:$0xff]
    %v1066 = vld [vmem:[#allocation2 + $0xd0] sm:$0xff]
    %v1067 = vld [vmem:[#allocation2 + $0xd8] sm:$0xff]
    %v1068 = vld [vmem:[#allocation2 + $0xe0] sm:$0xff]
    %v1069 = vld [vmem:[#allocation2 + $0xe8] sm:$0xff]
    %v1070 = vld [vmem:[#allocation2 + $0xf0] sm:$0xff]
    %v1071 = vld [vmem:[#allocation2 + $0xf8] sm:$0xff]
    %1072 = vmatprep.subr.mxu0 %v1041
    %1073 = vmatpush1.msra.mxu0 %v1040
    %1074 = vmatprep.subr.mxu0 %v1043
    %1075 = vmatpush1.msra.mxu0 %v1042
    %1076 = vmatprep.subr.mxu0 %v1045
    %1077 = vmatpush1.msra.mxu0 %v1044
    %1078 = vmatprep.subr.mxu0 %v1047
    %1079 = vmatpush1.msra.mxu0 %v1046
    %1080 = vmatprep.subr.mxu0 %v1049
    %1081 = vmatpush1.msra.mxu0 %v1048
    %1082 = vmatprep.subr.mxu0 %v1051
    %1083 = vmatpush1.msra.mxu0 %v1050
    %1084 = vmatprep.subr.mxu0 %v1053
    %1085 = vmatpush1.msra.mxu0 %v1052
    %1086 = vmatprep.subr.mxu0 %v1055
    %1087 = vmatpush1.msra.mxu0 %v1054
    %1088 = vmatprep.subr.mxu0 %v1057
    %1089 = vmatpush1.msra.mxu0 %v1056
    %1090 = vmatprep.subr.mxu0 %v1059
    %1091 = vmatpush1.msra.mxu0 %v1058
    %1092 = vmatprep.subr.mxu0 %v1061
    %1093 = vmatpush1.msra.mxu0 %v1060
    %1094 = vmatprep.subr.mxu0 %v1063
    %1095 = vmatpush1.msra.mxu0 %v1062
    %1096 = vmatprep.subr.mxu0 %v1065
    %1097 = vmatpush1.msra.mxu0 %v1064
    %1098 = vmatprep.subr.mxu0 %v1067
    %1099 = vmatpush1.msra.mxu0 %v1066
    %1100 = vmatprep.subr.mxu0 %v1069
    %1101 = vmatpush1.msra.mxu0 %v1068
    %1102 = vmatprep.subr.mxu0 %v1071
    %1103 = vmatpush1.msra.mxu0 %v1070
    %1104 = vmatprep.subr.mxu0 0.0
    %1105 = vmatpush1.msra.mxu0 0.0
    %1106 = vmatprep.subr.mxu0 0.0
    %1107 = vmatpush1.msra.mxu0 0.0
    %1108 = vmatprep.subr.mxu0 0.0
    %1109 = vmatpush1.msra.mxu0 0.0
    %1110 = vmatprep.subr.mxu0 0.0
    %1111 = vmatpush1.msra.mxu0 0.0
    %1112 = vmatprep.subr.mxu0 0.0
    %1113 = vmatpush1.msra.mxu0 0.0
    %1114 = vmatprep.subr.mxu0 0.0
    %1115 = vmatpush1.msra.mxu0 0.0
    %1116 = vmatprep.subr.mxu0 0.0
    %1117 = vmatpush1.msra.mxu0 0.0
    %1118 = vmatprep.subr.mxu0 0.0
    %1119 = vmatpush1.msra.mxu0 0.0
    %1120 = vmatprep.subr.mxu0 0.0
    %1121 = vmatpush1.msra.mxu0 0.0
    %1122 = vmatprep.subr.mxu0 0.0
    %1123 = vmatpush1.msra.mxu0 0.0
    %1124 = vmatprep.subr.mxu0 0.0
    %1125 = vmatpush1.msra.mxu0 0.0
    %1126 = vmatprep.subr.mxu0 0.0
    %1127 = vmatpush1.msra.mxu0 0.0
    %1128 = vmatprep.subr.mxu0 0.0
    %1129 = vmatpush1.msra.mxu0 0.0
    %1130 = vmatprep.subr.mxu0 0.0
    %1131 = vmatpush1.msra.mxu0 0.0
    %1132 = vmatprep.subr.mxu0 0.0
    %1133 = vmatpush1.msra.mxu0 0.0
    %1134 = vmatprep.subr.mxu0 0.0
    %1135 = vmatpush1.msra.mxu0 0.0
    %1136 = vmatprep.mubr.f32.mxu0 0.0
    %1137 = vmatmul.mubr.f32.gmra.mrb[0].mxu0 %v1024
    %v1138 = vpop.f32.mrb[0].mxu0
    %v1139 = vadd.f32 0.0, %v1138
    %v1140 = vpop.f32.mrb[0].mxu0
    %v1141 = vadd.f32 0.0, %v1140
    %1142 = vmatprep.mubr.f32.mxu0 0.0
    %1143 = vmatmul.mubr.f32.gmra.mrb[0].mxu0 %v1025
    %v1144 = vpop.f32.mrb[0].mxu0
    %v1145 = vadd.f32 0.0, %v1144
    %v1146 = vpop.f32.mrb[0].mxu0
    %v1147 = vadd.f32 0.0, %v1146
    %1148 = vmatprep.mubr.f32.mxu0 0.0
    %1149 = vmatmul.mubr.f32.gmra.mrb[0].mxu0 %v1026
    %v1150 = vpop.f32.mrb[0].mxu0
    %v1151 = vadd.f32 0.0, %v1150
    %v1152 = vpop.f32.mrb[0].mxu0
    %v1153 = vadd.f32 0.0, %v1152
    %1154 = vmatprep.mubr.f32.mxu0 0.0
    %1155 = vmatmul.mubr.f32.gmra.mrb[0].mxu0 %v1027
    %v1156 = vpop.f32.mrb[0].mxu0
    %v1157 = vadd.f32 0.0, %v1156
    %v1158 = vpop.f32.mrb[0].mxu0
    %v1159 = vadd.f32 0.0, %v1158
    %1160 = vmatprep.mubr.f32.mxu0 0.0
    %1161 = vmatmul.mubr.f32.gmra.mrb[0].mxu0 %v1028
    %v1162 = vpop.f32.mrb[0].mxu0
    %v1163 = vadd.f32 0.0, %v1162
    %v1164 = vpop.f32.mrb[0].mxu0
    %v1165 = vadd.f32 0.0, %v1164
    %1166 = vmatprep.mubr.f32.mxu0 0.0
    %1167 = vmatmul.mubr.f32.gmra.mrb[0].mxu0 %v1029
    %v1168 = vpop.f32.mrb[0].mxu0
    %v1169 = vadd.f32 0.0, %v1168
    %v1170 = vpop.f32.mrb[0].mxu0
    %v1171 = vadd.f32 0.0, %v1170
    %1172 = vmatprep.mubr.f32.mxu0 0.0
    %1173 = vmatmul.mubr.f32.gmra.mrb[0].mxu0 %v1030
    %v1174 = vpop.f32.mrb[0].mxu0
    %v1175 = vadd.f32 0.0, %v1174
    %v1176 = vpop.f32.mrb[0].mxu0
    %v1177 = vadd.f32 0.0, %v1176
    %1178 = vmatprep.mubr.f32.mxu0 0.0
    %1179 = vmatmul.mubr.f32.gmra.mrb[0].mxu0 %v1031
    %v1180 = vpop.f32.mrb[0].mxu0
    %v1181 = vadd.f32 0.0, %v1180
    %v1182 = vpop.f32.mrb[0].mxu0
    %v1183 = vadd.f32 0.0, %v1182
    %1184 = vmatprep.mubr.f32.mxu0 0.0
    %1185 = vmatmul.mubr.f32.gmra.mrb[0].mxu0 %v1032
    %v1186 = vpop.f32.mrb[0].mxu0
    %v1187 = vadd.f32 0.0, %v1186
    %v1188 = vpop.f32.mrb[0].mxu0
    %v1189 = vadd.f32 0.0, %v1188
    %1190 = vmatprep.mubr.f32.mxu0 0.0
    %1191 = vmatmul.mubr.f32.gmra.mrb[0].mxu0 %v1033
    %v1192 = vpop.f32.mrb[0].mxu0
    %v1193 = vadd.f32 0.0, %v1192
    %v1194 = vpop.f32.mrb[0].mxu0
    %v1195 = vadd.f32 0.0, %v1194
    %1196 = vmatprep.mubr.f32.mxu0 0.0
    %1197 = vmatmul.mubr.f32.gmra.mrb[0].mxu0 %v1034
    %v1198 = vpop.f32.mrb[0].mxu0
    %v1199 = vadd.f32 0.0, %v1198
    %v1200 = vpop.f32.mrb[0].mxu0
    %v1201 = vadd.f32 0.0, %v1200
    %1202 = vmatprep.mubr.f32.mxu0 0.0
    %1203 = vmatmul.mubr.f32.gmra.mrb[0].mxu0 %v1035
    %v1204 = vpop.f32.mrb[0].mxu0
    %v1205 = vadd.f32 0.0, %v1204
    %v1206 = vpop.f32.mrb[0].mxu0
    %v1207 = vadd.f32 0.0, %v1206
    %1208 = vmatprep.mubr.f32.mxu0 0.0
    %1209 = vmatmul.mubr.f32.gmra.mrb[0].mxu0 %v1036
    %v1210 = vpop.f32.mrb[0].mxu0
    %v1211 = vadd.f32 0.0, %v1210
    %v1212 = vpop.f32.mrb[0].mxu0
    %v1213 = vadd.f32 0.0, %v1212
    %1214 = vmatprep.mubr.f32.mxu0 0.0
    %1215 = vmatmul.mubr.f32.gmra.mrb[0].mxu0 %v1037
    %v1216 = vpop.f32.mrb[0].mxu0
    %v1217 = vadd.f32 0.0, %v1216
    %v1218 = vpop.f32.mrb[0].mxu0
    %v1219 = vadd.f32 0.0, %v1218
    %1220 = vmatprep.mubr.f32.mxu0 0.0
    %1221 = vmatmul.mubr.f32.gmra.mrb[0].mxu0 %v1038
    %v1222 = vpop.f32.mrb[0].mxu0
    %v1223 = vadd.f32 0.0, %v1222
    %v1224 = vpop.f32.mrb[0].mxu0
    %v1225 = vadd.f32 0.0, %v1224
    %1226 = vmatprep.mubr.f32.mxu0 0.0
    %1227 = vmatmul.mubr.f32.gmra.mrb[0].mxu0 %v1039
    %v1228 = vpop.f32.mrb[0].mxu0
    %v1229 = vadd.f32 0.0, %v1228
    %v1230 = vpop.f32.mrb[0].mxu0
    %v1231 = vadd.f32 0.0, %v1230
    %1232 = vdwg.mxu0
    %1233 = vst [vmem:[#allocation3] sm:$0xff] %v1139
    %1234 = vst [vmem:[#allocation3 + $0x8] sm:$0xff] %v1141
    %1235 = vst [vmem:[#allocation3 + $0x10] sm:$0xff] %v1145
    %1236 = vst [vmem:[#allocation3 + $0x18] sm:$0xff] %v1147
    %1237 = vst [vmem:[#allocation3 + $0x20] sm:$0xff] %v1151
    %1238 = vst [vmem:[#allocation3 + $0x28] sm:$0xff] %v1153
    %1239 = vst [vmem:[#allocation3 + $0x30] sm:$0xff] %v1157
    %1240 = vst [vmem:[#allocation3 + $0x38] sm:$0xff] %v1159
    %1241 = vst [vmem:[#allocation3 + $0x40] sm:$0xff] %v1163
    %1242 = vst [vmem:[#allocation3 + $0x48] sm:$0xff] %v1165
    %1243 = vst [vmem:[#allocation3 + $0x50] sm:$0xff] %v1169
    %1244 = vst [vmem:[#allocation3 + $0x58] sm:$0xff] %v1171
    %1245 = vst [vmem:[#allocation3 + $0x60] sm:$0xff] %v1175
    %1246 = vst [vmem:[#allocation3 + $0x68] sm:$0xff] %v1177
    %1247 = vst [vmem:[#allocation3 + $0x70] sm:$0xff] %v1181
    %1248 = vst [vmem:[#allocation3 + $0x78] sm:$0xff] %v1183
    %1249 = vst [vmem:[#allocation3 + $0x80] sm:$0xff] %v1187
    %1250 = vst [vmem:[#allocation3 + $0x88] sm:$0xff] %v1189
    %1251 = vst [vmem:[#allocation3 + $0x90] sm:$0xff] %v1193
    %1252 = vst [vmem:[#allocation3 + $0x98] sm:$0xff] %v1195
    %1253 = vst [vmem:[#allocation3 + $0xa0] sm:$0xff] %v1199
    %1254 = vst [vmem:[#allocation3 + $0xa8] sm:$0xff] %v1201
    %1255 = vst [vmem:[#allocation3 + $0xb0] sm:$0xff] %v1205
    %1256 = vst [vmem:[#allocation3 + $0xb8] sm:$0xff] %v1207
    %1257 = vst [vmem:[#allocation3 + $0xc0] sm:$0xff] %v1211
    %1258 = vst [vmem:[#allocation3 + $0xc8] sm:$0xff] %v1213
    %1259 = vst [vmem:[#allocation3 + $0xd0] sm:$0xff] %v1217
    %1260 = vst [vmem:[#allocation3 + $0xd8] sm:$0xff] %v1219
    %1261 = vst [vmem:[#allocation3 + $0xe0] sm:$0xff] %v1223
    %1262 = vst [vmem:[#allocation3 + $0xe8] sm:$0xff] %v1225
    %1263 = vst [vmem:[#allocation3 + $0xf0] sm:$0xff] %v1229
    %1264 = vst [vmem:[#allocation3 + $0xf8] sm:$0xff] %v1231
    %v1265 = vld [vmem:[#allocation3] sm:$0xff]
    %v1266 = vld [vmem:[#allocation3 + $0x10] sm:$0xff]
    %v1267 = vld [vmem:[#allocation3 + $0x20] sm:$0xff]
    %v1268 = vld [vmem:[#allocation3 + $0x30] sm:$0xff]
    %v1269 = vld [vmem:[#allocation3 + $0x40] sm:$0xff]
    %v1270 = vld [vmem:[#allocation3 + $0x50] sm:$0xff]
    %v1271 = vld [vmem:[#allocation3 + $0x60] sm:$0xff]
    %v1272 = vld [vmem:[#allocation3 + $0x70] sm:$0xff]
    %v1273 = vld [vmem:[#allocation3 + $0x80] sm:$0xff]
    %v1274 = vld [vmem:[#allocation3 + $0x90] sm:$0xff]
    %v1275 = vld [vmem:[#allocation3 + $0xa0] sm:$0xff]
    %v1276 = vld [vmem:[#allocation3 + $0xb0] sm:$0xff]
    %v1277 = vld [vmem:[#allocation3 + $0xc0] sm:$0xff]
    %v1278 = vld [vmem:[#allocation3 + $0xd0] sm:$0xff]
    %v1279 = vld [vmem:[#allocation3 + $0xe0] sm:$0xff]
    %v1280 = vld [vmem:[#allocation3 + $0xf0] sm:$0xff]
    %v1281 = vld [vmem:[%s7] sm:$0xff]
    %v1282 = vld [vmem:[%s7 + $0x8] sm:$0xff]
    %v1283 = vld [vmem:[%s7 + $0x10] sm:$0xff]
    %v1284 = vld [vmem:[%s7 + $0x18] sm:$0xff]
    %v1285 = vld [vmem:[%s7 + $0x20] sm:$0xff]
    %v1286 = vld [vmem:[%s7 + $0x28] sm:$0xff]
    %v1287 = vld [vmem:[%s7 + $0x30] sm:$0xff]
    %v1288 = vld [vmem:[%s7 + $0x38] sm:$0xff]
    %v1289 = vld [vmem:[%s7 + $0x40] sm:$0xff]
    %v1290 = vld [vmem:[%s7 + $0x48] sm:$0xff]
    %v1291 = vld [vmem:[%s7 + $0x50] sm:$0xff]
    %v1292 = vld [vmem:[%s7 + $0x58] sm:$0xff]
    %v1293 = vld [vmem:[%s7 + $0x60] sm:$0xff]
    %v1294 = vld [vmem:[%s7 + $0x68] sm:$0xff]
    %v1295 = vld [vmem:[%s7 + $0x70] sm:$0xff]
    %v1296 = vld [vmem:[%s7 + $0x78] sm:$0xff]
    %1298 = vset.pattern.permute.xlu0 0
    %1299 = vperm.xlu0 %1298, %v1281
    %v1300 = vpop.permute.xlu0 %1299
    %1303 = vset.pattern.permute.xlu0 0
    %1304 = vperm.xlu0 %1303, %v1282
    %v1305 = vpop.permute.xlu0 %1304
    %1308 = vset.pattern.permute.xlu0 0
    %1309 = vperm.xlu0 %1308, %v1283
    %v1310 = vpop.permute.xlu0 %1309
    %1313 = vset.pattern.permute.xlu0 0
    %1314 = vperm.xlu0 %1313, %v1284
    %v1315 = vpop.permute.xlu0 %1314
    %1318 = vset.pattern.permute.xlu0 0
    %1319 = vperm.xlu0 %1318, %v1285
    %v1320 = vpop.permute.xlu0 %1319
    %1323 = vset.pattern.permute.xlu0 0
    %1324 = vperm.xlu0 %1323, %v1286
    %v1325 = vpop.permute.xlu0 %1324
    %1328 = vset.pattern.permute.xlu0 0
    %1329 = vperm.xlu0 %1328, %v1287
    %v1330 = vpop.permute.xlu0 %1329
    %1333 = vset.pattern.permute.xlu0 0
    %1334 = vperm.xlu0 %1333, %v1288
    %v1335 = vpop.permute.xlu0 %1334
    %1338 = vset.pattern.permute.xlu0 0
    %1339 = vperm.xlu0 %1338, %v1289
    %v1340 = vpop.permute.xlu0 %1339
    %1343 = vset.pattern.permute.xlu0 0
    %1344 = vperm.xlu0 %1343, %v1290
    %v1345 = vpop.permute.xlu0 %1344
    %1348 = vset.pattern.permute.xlu0 0
    %1349 = vperm.xlu0 %1348, %v1291
    %v1350 = vpop.permute.xlu0 %1349
    %1353 = vset.pattern.permute.xlu0 0
    %1354 = vperm.xlu0 %1353, %v1292
    %v1355 = vpop.permute.xlu0 %1354
    %1358 = vset.pattern.permute.xlu0 0
    %1359 = vperm.xlu0 %1358, %v1293
    %v1360 = vpop.permute.xlu0 %1359
    %1363 = vset.pattern.permute.xlu0 0
    %1364 = vperm.xlu0 %1363, %v1294
    %v1365 = vpop.permute.xlu0 %1364
    %1368 = vset.pattern.permute.xlu0 0
    %1369 = vperm.xlu0 %1368, %v1295
    %v1370 = vpop.permute.xlu0 %1369
    %1373 = vset.pattern.permute.xlu0 0
    %1374 = vperm.xlu0 %1373, %v1296
    %v1375 = vpop.permute.xlu0 %1374
    %v1377 = vadd.f32 %v1265, %v1300
    %v1378 = vadd.f32 %v1266, %v1305
    %v1379 = vadd.f32 %v1267, %v1310
    %v1380 = vadd.f32 %v1268, %v1315
    %v1381 = vadd.f32 %v1269, %v1320
    %v1382 = vadd.f32 %v1270, %v1325
    %v1383 = vadd.f32 %v1271, %v1330
    %v1384 = vadd.f32 %v1272, %v1335
    %v1385 = vadd.f32 %v1273, %v1340
    %v1386 = vadd.f32 %v1274, %v1345
    %v1387 = vadd.f32 %v1275, %v1350
    %v1388 = vadd.f32 %v1276, %v1355
    %v1389 = vadd.f32 %v1277, %v1360
    %v1390 = vadd.f32 %v1278, %v1365
    %v1391 = vadd.f32 %v1279, %v1370
    %v1392 = vadd.f32 %v1280, %v1375
    %vm1393 = vcmp.gt.f32.partialorder %v1377, 0.0
    %vm1394 = vcmp.gt.f32.partialorder %v1378, 0.0
    %vm1395 = vcmp.gt.f32.partialorder %v1379, 0.0
    %vm1396 = vcmp.gt.f32.partialorder %v1380, 0.0
    %vm1397 = vcmp.gt.f32.partialorder %v1381, 0.0
    %vm1398 = vcmp.gt.f32.partialorder %v1382, 0.0
    %vm1399 = vcmp.gt.f32.partialorder %v1383, 0.0
    %vm1400 = vcmp.gt.f32.partialorder %v1384, 0.0
    %vm1401 = vcmp.gt.f32.partialorder %v1385, 0.0
    %vm1402 = vcmp.gt.f32.partialorder %v1386, 0.0
    %vm1403 = vcmp.gt.f32.partialorder %v1387, 0.0
    %vm1404 = vcmp.gt.f32.partialorder %v1388, 0.0
    %vm1405 = vcmp.gt.f32.partialorder %v1389, 0.0
    %vm1406 = vcmp.gt.f32.partialorder %v1390, 0.0
    %vm1407 = vcmp.gt.f32.partialorder %v1391, 0.0
    %vm1408 = vcmp.gt.f32.partialorder %v1392, 0.0
    %v1409 = vsel %vm1393, 1.0, 0.2
    %v1410 = vsel %vm1394, 1.0, 0.2
    %v1411 = vsel %vm1395, 1.0, 0.2
    %v1412 = vsel %vm1396, 1.0, 0.2
    %v1413 = vsel %vm1397, 1.0, 0.2
    %v1414 = vsel %vm1398, 1.0, 0.2
    %v1415 = vsel %vm1399, 1.0, 0.2
    %v1416 = vsel %vm1400, 1.0, 0.2
    %v1417 = vsel %vm1401, 1.0, 0.2
    %v1418 = vsel %vm1402, 1.0, 0.2
    %v1419 = vsel %vm1403, 1.0, 0.2
    %v1420 = vsel %vm1404, 1.0, 0.2
    %v1421 = vsel %vm1405, 1.0, 0.2
    %v1422 = vsel %vm1406, 1.0, 0.2
    %v1423 = vsel %vm1407, 1.0, 0.2
    %v1424 = vsel %vm1408, 1.0, 0.2
    %v1425 = vmul.f32 %v1377, %v1409
    %v1426 = vmul.f32 %v1378, %v1410
    %v1427 = vmul.f32 %v1379, %v1411
    %v1428 = vmul.f32 %v1380, %v1412
    %v1429 = vmul.f32 %v1381, %v1413
    %v1430 = vmul.f32 %v1382, %v1414
    %v1431 = vmul.f32 %v1383, %v1415
    %v1432 = vmul.f32 %v1384, %v1416
    %v1433 = vmul.f32 %v1385, %v1417
    %v1434 = vmul.f32 %v1386, %v1418
    %v1435 = vmul.f32 %v1387, %v1419
    %v1436 = vmul.f32 %v1388, %v1420
    %v1437 = vmul.f32 %v1389, %v1421
    %v1438 = vmul.f32 %v1390, %v1422
    %v1439 = vmul.f32 %v1391, %v1423
    %v1440 = vmul.f32 %v1392, %v1424
    %v1441 = vld [vmem:[#allocation3 + $0x8] sm:$0xff]
    %v1442 = vld [vmem:[#allocation3 + $0x18] sm:$0xff]
    %v1443 = vld [vmem:[#allocation3 + $0x28] sm:$0xff]
    %v1444 = vld [vmem:[#allocation3 + $0x38] sm:$0xff]
    %v1445 = vld [vmem:[#allocation3 + $0x48] sm:$0xff]
    %v1446 = vld [vmem:[#allocation3 + $0x58] sm:$0xff]
    %v1447 = vld [vmem:[#allocation3 + $0x68] sm:$0xff]
    %v1448 = vld [vmem:[#allocation3 + $0x78] sm:$0xff]
    %v1449 = vld [vmem:[#allocation3 + $0x88] sm:$0xff]
    %v1450 = vld [vmem:[#allocation3 + $0x98] sm:$0xff]
    %v1451 = vld [vmem:[#allocation3 + $0xa8] sm:$0xff]
    %v1452 = vld [vmem:[#allocation3 + $0xb8] sm:$0xff]
    %v1453 = vld [vmem:[#allocation3 + $0xc8] sm:$0xff]
    %v1454 = vld [vmem:[#allocation3 + $0xd8] sm:$0xff]
    %v1455 = vld [vmem:[#allocation3 + $0xe8] sm:$0xff]
    %v1456 = vld [vmem:[#allocation3 + $0xf8] sm:$0xff]
    %v1457 = vmul.f32 %v1441, %v1409
    %v1458 = vmul.f32 %v1442, %v1410
    %v1459 = vmul.f32 %v1443, %v1411
    %v1460 = vmul.f32 %v1444, %v1412
    %v1461 = vmul.f32 %v1445, %v1413
    %v1462 = vmul.f32 %v1446, %v1414
    %v1463 = vmul.f32 %v1447, %v1415
    %v1464 = vmul.f32 %v1448, %v1416
    %v1465 = vmul.f32 %v1449, %v1417
    %v1466 = vmul.f32 %v1450, %v1418
    %v1467 = vmul.f32 %v1451, %v1419
    %v1468 = vmul.f32 %v1452, %v1420
    %v1469 = vmul.f32 %v1453, %v1421
    %v1470 = vmul.f32 %v1454, %v1422
    %v1471 = vmul.f32 %v1455, %v1423
    %v1472 = vmul.f32 %v1456, %v1424
    %1473 = vst [vmem:[#allocation2] sm:$0xff] %v1425
    %1474 = vst [vmem:[#allocation2 + $0x10] sm:$0xff] %v1426
    %1475 = vst [vmem:[#allocation2 + $0x20] sm:$0xff] %v1427
    %1476 = vst [vmem:[#allocation2 + $0x30] sm:$0xff] %v1428
    %1477 = vst [vmem:[#allocation2 + $0x40] sm:$0xff] %v1429
    %1478 = vst [vmem:[#allocation2 + $0x50] sm:$0xff] %v1430
    %1479 = vst [vmem:[#allocation2 + $0x60] sm:$0xff] %v1431
    %1480 = vst [vmem:[#allocation2 + $0x70] sm:$0xff] %v1432
    %1481 = vst [vmem:[#allocation2 + $0x80] sm:$0xff] %v1433
    %1482 = vst [vmem:[#allocation2 + $0x90] sm:$0xff] %v1434
    %1483 = vst [vmem:[#allocation2 + $0xa0] sm:$0xff] %v1435
    %1484 = vst [vmem:[#allocation2 + $0xb0] sm:$0xff] %v1436
    %1485 = vst [vmem:[#allocation2 + $0xc0] sm:$0xff] %v1437
    %1486 = vst [vmem:[#allocation2 + $0xd0] sm:$0xff] %v1438
    %1487 = vst [vmem:[#allocation2 + $0xe0] sm:$0xff] %v1439
    %1488 = vst [vmem:[#allocation2 + $0xf0] sm:$0xff] %v1440
    %1489 = vst [vmem:[#allocation2 + $0x8] sm:$0xff] %v1457
    %1490 = vst [vmem:[#allocation2 + $0x18] sm:$0xff] %v1458
    %1491 = vst [vmem:[#allocation2 + $0x28] sm:$0xff] %v1459
    %1492 = vst [vmem:[#allocation2 + $0x38] sm:$0xff] %v1460
    %1493 = vst [vmem:[#allocation2 + $0x48] sm:$0xff] %v1461
    %1494 = vst [vmem:[#allocation2 + $0x58] sm:$0xff] %v1462
    %1495 = vst [vmem:[#allocation2 + $0x68] sm:$0xff] %v1463
    %1496 = vst [vmem:[#allocation2 + $0x78] sm:$0xff] %v1464
    %1497 = vst [vmem:[#allocation2 + $0x88] sm:$0xff] %v1465
    %1498 = vst [vmem:[#allocation2 + $0x98] sm:$0xff] %v1466
    %1499 = vst [vmem:[#allocation2 + $0xa8] sm:$0xff] %v1467
    %1500 = vst [vmem:[#allocation2 + $0xb8] sm:$0xff] %v1468
    %1501 = vst [vmem:[#allocation2 + $0xc8] sm:$0xff] %v1469
    %1502 = vst [vmem:[#allocation2 + $0xd8] sm:$0xff] %v1470
    %1503 = vst [vmem:[#allocation2 + $0xe8] sm:$0xff] %v1471
    %1504 = vst [vmem:[#allocation2 + $0xf8] sm:$0xff] %v1472
    %v1505 = vld [vmem:[%s8] sm:$0xf]
    %v1506 = vld [vmem:[#allocation2] sm:$0xff]
    %v1507 = vld [vmem:[#allocation2 + $0x8] sm:$0xff]
    %v1508 = vld [vmem:[#allocation2 + $0x10] sm:$0xff]
    %v1509 = vld [vmem:[#allocation2 + $0x18] sm:$0xff]
    %v1510 = vld [vmem:[#allocation2 + $0x20] sm:$0xff]
    %v1511 = vld [vmem:[#allocation2 + $0x28] sm:$0xff]
    %v1512 = vld [vmem:[#allocation2 + $0x30] sm:$0xff]
    %v1513 = vld [vmem:[#allocation2 + $0x38] sm:$0xff]
    %v1514 = vld [vmem:[#allocation2 + $0x40] sm:$0xff]
    %v1515 = vld [vmem:[#allocation2 + $0x48] sm:$0xff]
    %v1516 = vld [vmem:[#allocation2 + $0x50] sm:$0xff]
    %v1517 = vld [vmem:[#allocation2 + $0x58] sm:$0xff]
    %v1518 = vld [vmem:[#allocation2 + $0x60] sm:$0xff]
    %v1519 = vld [vmem:[#allocation2 + $0x68] sm:$0xff]
    %v1520 = vld [vmem:[#allocation2 + $0x70] sm:$0xff]
    %v1521 = vld [vmem:[#allocation2 + $0x78] sm:$0xff]
    %v1522 = vld [vmem:[#allocation2 + $0x80] sm:$0xff]
    %v1523 = vld [vmem:[#allocation2 + $0x88] sm:$0xff]
    %v1524 = vld [vmem:[#allocation2 + $0x90] sm:$0xff]
    %v1525 = vld [vmem:[#allocation2 + $0x98] sm:$0xff]
    %v1526 = vld [vmem:[#allocation2 + $0xa0] sm:$0xff]
    %v1527 = vld [vmem:[#allocation2 + $0xa8] sm:$0xff]
    %v1528 = vld [vmem:[#allocation2 + $0xb0] sm:$0xff]
    %v1529 = vld [vmem:[#allocation2 + $0xb8] sm:$0xff]
    %v1530 = vld [vmem:[#allocation2 + $0xc0] sm:$0xff]
    %v1531 = vld [vmem:[#allocation2 + $0xc8] sm:$0xff]
    %v1532 = vld [vmem:[#allocation2 + $0xd0] sm:$0xff]
    %v1533 = vld [vmem:[#allocation2 + $0xd8] sm:$0xff]
    %v1534 = vld [vmem:[#allocation2 + $0xe0] sm:$0xff]
    %v1535 = vld [vmem:[#allocation2 + $0xe8] sm:$0xff]
    %v1536 = vld [vmem:[#allocation2 + $0xf0] sm:$0xff]
    %v1537 = vld [vmem:[#allocation2 + $0xf8] sm:$0xff]
    %1538 = vmatprep.subr.mxu0 %v1507
    %1539 = vmatpush1.msra.mxu0 %v1506
    %1540 = vmatprep.subr.mxu0 %v1509
    %1541 = vmatpush1.msra.mxu0 %v1508
    %1542 = vmatprep.subr.mxu0 %v1511
    %1543 = vmatpush1.msra.mxu0 %v1510
    %1544 = vmatprep.subr.mxu0 %v1513
    %1545 = vmatpush1.msra.mxu0 %v1512
    %1546 = vmatprep.subr.mxu0 %v1515
    %1547 = vmatpush1.msra.mxu0 %v1514
    %1548 = vmatprep.subr.mxu0 %v1517
    %1549 = vmatpush1.msra.mxu0 %v1516
    %1550 = vmatprep.subr.mxu0 %v1519
    %1551 = vmatpush1.msra.mxu0 %v1518
    %1552 = vmatprep.subr.mxu0 %v1521
    %1553 = vmatpush1.msra.mxu0 %v1520
    %1554 = vmatprep.subr.mxu0 %v1523
    %1555 = vmatpush1.msra.mxu0 %v1522
    %1556 = vmatprep.subr.mxu0 %v1525
    %1557 = vmatpush1.msra.mxu0 %v1524
    %1558 = vmatprep.subr.mxu0 %v1527
    %1559 = vmatpush1.msra.mxu0 %v1526
    %1560 = vmatprep.subr.mxu0 %v1529
    %1561 = vmatpush1.msra.mxu0 %v1528
    %1562 = vmatprep.subr.mxu0 %v1531
    %1563 = vmatpush1.msra.mxu0 %v1530
    %1564 = vmatprep.subr.mxu0 %v1533
    %1565 = vmatpush1.msra.mxu0 %v1532
    %1566 = vmatprep.subr.mxu0 %v1535
    %1567 = vmatpush1.msra.mxu0 %v1534
    %1568 = vmatprep.subr.mxu0 %v1537
    %1569 = vmatpush1.msra.mxu0 %v1536
    %1570 = vmatprep.subr.mxu0 0.0
    %1571 = vmatpush1.msra.mxu0 0.0
    %1572 = vmatprep.subr.mxu0 0.0
    %1573 = vmatpush1.msra.mxu0 0.0
    %1574 = vmatprep.subr.mxu0 0.0
    %1575 = vmatpush1.msra.mxu0 0.0
    %1576 = vmatprep.subr.mxu0 0.0
    %1577 = vmatpush1.msra.mxu0 0.0
    %1578 = vmatprep.subr.mxu0 0.0
    %1579 = vmatpush1.msra.mxu0 0.0
    %1580 = vmatprep.subr.mxu0 0.0
    %1581 = vmatpush1.msra.mxu0 0.0
    %1582 = vmatprep.subr.mxu0 0.0
    %1583 = vmatpush1.msra.mxu0 0.0
    %1584 = vmatprep.subr.mxu0 0.0
    %1585 = vmatpush1.msra.mxu0 0.0
    %1586 = vmatprep.subr.mxu0 0.0
    %1587 = vmatpush1.msra.mxu0 0.0
    %1588 = vmatprep.subr.mxu0 0.0
    %1589 = vmatpush1.msra.mxu0 0.0
    %1590 = vmatprep.subr.mxu0 0.0
    %1591 = vmatpush1.msra.mxu0 0.0
    %1592 = vmatprep.subr.mxu0 0.0
    %1593 = vmatpush1.msra.mxu0 0.0
    %1594 = vmatprep.subr.mxu0 0.0
    %1595 = vmatpush1.msra.mxu0 0.0
    %1596 = vmatprep.subr.mxu0 0.0
    %1597 = vmatpush1.msra.mxu0 0.0
    %1598 = vmatprep.subr.mxu0 0.0
    %1599 = vmatpush1.msra.mxu0 0.0
    %1600 = vmatprep.subr.mxu0 0.0
    %1601 = vmatpush1.msra.mxu0 0.0
    %1602 = vmatprep.mubr.f32.mxu0 0.0
    %1603 = vmatmul.mubr.f32.gmra.mrb[0].mxu0 %v1505
    %v1604 = vpop.f32.mrb[0].mxu0
    %v1605 = vadd.f32 0.0, %v1604
    %v1606 = vpop.f32.mrb[0].mxu0
    %v1607 = vadd.f32 0.0, %v1606
    %1608 = vdwg.mxu0
    %v1611 = vcombine.low %v1605, %v1607
    %1613 = vst [vmem:[#allocation4] sm:$0xff] %v1611
    %v1614 = vld [vmem:[#allocation4] sm:$0xf]
    %v1615 = vld [vmem:[%s9] sm:$0xf]
    %1617 = vset.pattern.permute.xlu0 0
    %1618 = vperm.xlu0 %1617, %v1615
    %v1619 = vpop.permute.xlu0 %1618
    %v1621 = vadd.f32 %v1614, %v1619
    %1622 = vst [vmem:[#allocation5] sm:$0xf] %v1621
    %v1623 = vld [vmem:[#allocation4 + $0x4] sm:$0xf]
    %v1624 = vand.u32 2147483647, %v1623
    %v1625 = vlog2.pop %v1624
    %v1626 = vmul.f32 %v1625, 0.6931472
    %v1627 = vsel %vm202, %v1626, 0.0
    %v1628 = vrot.slane %v1627, 4
    %v1629 = vadd.f32 %v1627, %v1628
    %v1630 = vrot.slane %v1629, 2
    %v1631 = vadd.f32 %v1629, %v1630
    %v1632 = vrot.slane %v1631, 1
    %v1633 = vadd.f32 %v1631, %v1632
    %1634 = vst [vmem:[#allocation7] sm:$0x1] %v1633
    // Predicated region
    $region42: #{tpu_custom_call.1} parent=1 // pred_check
      _
    $region43: #{tpu_custom_call.1} parent=1 // pred_check_branch
      %1636 = sbr.rel (0) target = $region45
    $region44: #{tpu_custom_call.1} parent=1 // pred_region
      %s1638 = ssub.s32 64, 64
      %1639 = vsyncadd [#allocation6], %s1638
      %s1641 = sshll.u32 [#allocation5], 4
      %s1642 = int_to_ptr.vmem [resolvable:$true] %s1641
      %1644 = dma.vmem_to_hbm [thread:$0]  %s1642, 64, %s10, [#allocation6]
    $region45: #{tpu_custom_call.1} parent=1 // pred_fallthru
      _
    // Predicated region
    $region46: #{tpu_custom_call.1} parent=1 // pred_check
      _
    $region47: #{tpu_custom_call.1} parent=1 // pred_check_branch
      %1646 = sbr.rel (0) target = $region49
    $region48: #{tpu_custom_call.1} parent=1 // pred_region
      %s1648 = ssub.s32 16, 16
      %1649 = vsyncadd [#allocation8], %s1648
      %s1651 = sshll.u32 [#allocation7], 4
      %s1652 = int_to_ptr.vmem [resolvable:$true] %s1651
      %1654 = dma.vmem_to_hbm [thread:$0]  %s1652, 16, %s11, [#allocation8]
    $region49: #{tpu_custom_call.1} parent=1 // pred_fallthru
      _
    // Predicated region
    $region50: #{tpu_custom_call.1} parent=1 // pred_check
      _
    $region51: #{tpu_custom_call.1} parent=1 // pred_check_branch
      %1656 = sbr.rel (0) target = $region53
    $region52: #{tpu_custom_call.1} parent=1 // pred_region
      %1657 = dma.done [#allocation6], 64
    $region53: #{tpu_custom_call.1} parent=1 // pred_fallthru
      _
    // Predicated region
    $region54: #{tpu_custom_call.1} parent=1 // pred_check
      _
    $region55: #{tpu_custom_call.1} parent=1 // pred_check_branch
      %1659 = sbr.rel (0) target = $region57
    $region56: #{tpu_custom_call.1} parent=1 // pred_region
      %1660 = dma.done [#allocation8], 16
    $region57: #{tpu_custom_call.1} parent=1 // pred_fallthru
      _
    %1661 = vsyncpa [#allocation6], 1
    %1662 = vsyncpa [#allocation8], 1

</llo_original>
